<compile_context>
chip_gen: v7x
topology: tpu7x:2x2x1
jax: 0.10.0
libtpu: 0.0.40
codegen_flags: <defaults>
</compile_context>

<pallas_src>
import jax
import jax.numpy as jnp
from jax.experimental import pallas as pl
from jax.experimental.pallas import tpu as pltpu


def _round_up(n, m):
    return ((n + m - 1) // m) * m


def mlp_kernel(x_ref, w1_ref, b1_ref, w2_ref, b2_ref, o_ref):
    # First linear: bf16 x bf16 on the MXU, f32 accumulate, f32 bias + ReLU.
    h = jnp.dot(x_ref[...], w1_ref[...],
                preferred_element_type=jnp.float32)            # [TM, 512] f32
    h = jnp.maximum(h + b1_ref[...], 0.0)

    # Dropout(p=0.2): identity in eval mode (see TODO above).

    # Second linear + Sigmoid (exp + approx reciprocal run on the EUP).
    logits = jnp.dot(h.astype(jnp.bfloat16), w2_ref[...],
                     preferred_element_type=jnp.float32)       # [TM, 10] f32
    logits = logits + b2_ref[...]
    o_ref[...] = pl.reciprocal(1.0 + jnp.exp(-logits), approx=True)


def pack_params(w1, b1, w2, b2):
    """One-time (init-time) packing: weights -> bf16, biases -> f32.

    Weights are stored [in, out] so the kernel computes x @ W (== torch x @ W.T).
    Call this once and reuse the packed params for every mlp_forward call.
    """
    return (w1.astype(jnp.bfloat16), b1.astype(jnp.float32),
            w2.astype(jnp.bfloat16), b2.astype(jnp.float32))


def mlp_forward(x, w1, b1, w2, b2, tm=512):
    """x: [B, 784] (bf16 preferred); packed params from pack_params().

    Returns [B, 10] f32 sigmoid probabilities.
    """
    if x.dtype != jnp.bfloat16:
        # Callers should feed bf16 (cast where x is produced) to avoid this op.
        x = x.astype(jnp.bfloat16)

    B, K = x.shape
    H = w1.shape[1]
    N = w2.shape[1]

    # Batch tile: multiple of 8, capped at `tm`, and capped at ~ceil(B/2) so the
    # grid has >=2 tiles whenever B >= 16 (v7x: shard batch across both TCs).
    half = -(-B // 2)                       # ceil(B / 2)
    tm_eff = max(8, min(tm, _round_up(half, 8)))
    grid = (pl.cdiv(B, tm_eff),)            # ragged last tile handled by Pallas

    out = pl.pallas_call(
        mlp_kernel,
        out_shape=jax.ShapeDtypeStruct((B, N), jnp.float32),
        grid=grid,
        in_specs=[
            pl.BlockSpec((tm_eff, K), lambda i: (i, 0)),   # x: tiled over batch
            pl.BlockSpec((K, H), lambda i: (0, 0)),        # w1: VMEM-resident
            pl.BlockSpec((1, H), lambda i: (0, 0)),        # b1
            pl.BlockSpec((H, N), lambda i: (0, 0)),        # w2
            pl.BlockSpec((1, N), lambda i: (0, 0)),        # b2
        ],
        out_specs=pl.BlockSpec((tm_eff, N), lambda i: (i, 0)),
        compiler_params=pltpu.CompilerParams(
            dimension_semantics=("parallel",)),
    )(x, w1, b1, w2, b2)

    return out


def init_params(key):
    """Deterministic init mimicking nn.Linear default (uniform +-1/sqrt(fan_in))."""
    num_inputs, hidden, num_outputs = 28 * 28, 512, 10
    k1, k2, k3, k4 = jax.random.split(key, 4)
    bound1 = 1.0 / jnp.sqrt(num_inputs)
    bound2 = 1.0 / jnp.sqrt(hidden)
    # Stored as [in, out] so the kernel computes x @ W directly (== torch x @ W.T).
    w1 = jax.random.uniform(k1, (num_inputs, hidden), jnp.float32, -bound1, bound1)
    b1 = jax.random.uniform(k2, (1, hidden), jnp.float32, -bound1, bound1)
    w2 = jax.random.uniform(k3, (hidden, num_outputs), jnp.float32, -bound2, bound2)
    b2 = jax.random.uniform(k4, (1, num_outputs), jnp.float32, -bound2, bound2)
    return w1, b1, w2, b2


if __name__ == "__main__":
    key = jax.random.PRNGKey(0)
    k_param, k_input = jax.random.split(key)

    w1, b1, w2, b2 = init_params(k_param)
    packed = pack_params(w1, b1, w2, b2)          # hoisted, one-time packing

    B = 8                                         # small batch; features = 784
    x = jax.random.normal(k_input, (B, 28 * 28), jnp.float32)
    x_bf16 = x.astype(jnp.bfloat16)               # cast once where x is produced

    out = mlp_forward(x_bf16, *packed)
    out = jax.block_until_ready(out)

    # Sanity checks against a pure-JAX f32 reference of the same math.
    # Tolerance relaxed because the kernel runs the matmuls in bf16.
    ref = jax.nn.sigmoid(jnp.maximum(x @ w1 + b1, 0.0) @ w2 + b2)
    assert out.shape == (B, 10)
    assert out.dtype == jnp.float32
    assert jnp.allclose(out, ref, atol=2e-2, rtol=2e-2)
    assert bool(jnp.all((out >= 0.0) & (out <= 1.0)))

    print("KERNEL_OK")
</pallas_src>

<mosaic_0001>
module attributes {stable_mosaic.version = 11 : i64} {
  func.func @mlp_kernel(%arg0: i32, %arg1: memref<8x784xbf16, #tpu.memory_space<vmem>>, %arg2: memref<784x512xbf16, #tpu.memory_space<vmem>>, %arg3: memref<1x512xf32, #tpu.memory_space<vmem>>, %arg4: memref<512x10xbf16, #tpu.memory_space<vmem>>, %arg5: memref<1x10xf32, #tpu.memory_space<vmem>>, %arg6: memref<8x10xf32, #tpu.memory_space<vmem>>) attributes {dimension_semantics = [#tpu.dimension_semantics<parallel>], iteration_bounds = array<i64: 1>, scalar_prefetch = 0 : i64, scratch_operands = 0 : i64, tpu.core_type = #tpu.core_type<tc>, window_params = [{transform_indices = @transform_0, window_bounds = array<i64: 8, 784>}, {pipeline_mode = #tpu.pipeline_mode<synchronous>, transform_indices = @transform_1, window_bounds = array<i64: 784, 512>}, {pipeline_mode = #tpu.pipeline_mode<synchronous>, transform_indices = @transform_2, window_bounds = array<i64: 1, 512>}, {pipeline_mode = #tpu.pipeline_mode<synchronous>, transform_indices = @transform_3, window_bounds = array<i64: 512, 10>}, {pipeline_mode = #tpu.pipeline_mode<synchronous>, transform_indices = @transform_4, window_bounds = array<i64: 1, 10>}, {transform_indices = @transform_5, window_bounds = array<i64: 8, 10>}]} {
    %c0 = arith.constant 0 : index
    %c0_0 = arith.constant 0 : index
    %0 = vector.load %arg1[%c0, %c0_0] : memref<8x784xbf16, #tpu.memory_space<vmem>>, vector<8x784xbf16>
    %c0_1 = arith.constant 0 : index
    %c0_2 = arith.constant 0 : index
    %1 = vector.load %arg2[%c0_1, %c0_2] : memref<784x512xbf16, #tpu.memory_space<vmem>>, vector<784x512xbf16>
    %cst = arith.constant dense<0.000000e+00> : vector<8x512xf32>
    %2 = tpu.matmul %0, %1, %cst {dimension_numbers = #tpu.dot_dimension_numbers<[1], [0], [0], [1], [0, 0, 1, 1], [], []>} : vector<8x784xbf16>, vector<784x512xbf16>, vector<8x512xf32> -> vector<8x512xf32>
    %c0_3 = arith.constant 0 : index
    %c0_4 = arith.constant 0 : index
    %3 = vector.load %arg3[%c0_3, %c0_4] : memref<1x512xf32, #tpu.memory_space<vmem>>, vector<1x512xf32>
    %4 = vector.broadcast %3 : vector<1x512xf32> to vector<8x512xf32>
    %5 = arith.addf %2, %4 : vector<8x512xf32>
    %cst_5 = arith.constant 0.000000e+00 : f32
    %6 = vector.broadcast %cst_5 : f32 to vector<8x512xf32>
    %7 = arith.maximumf %5, %6 : vector<8x512xf32>
    %8 = arith.truncf %7 : vector<8x512xf32> to vector<8x512xbf16>
    %c0_6 = arith.constant 0 : index
    %c0_7 = arith.constant 0 : index
    %9 = vector.load %arg4[%c0_6, %c0_7] : memref<512x10xbf16, #tpu.memory_space<vmem>>, vector<512x10xbf16>
    %cst_8 = arith.constant dense<0.000000e+00> : vector<8x10xf32>
    %10 = tpu.matmul %8, %9, %cst_8 {dimension_numbers = #tpu.dot_dimension_numbers<[1], [0], [0], [1], [0, 0, 1, 1], [], []>} : vector<8x512xbf16>, vector<512x10xbf16>, vector<8x10xf32> -> vector<8x10xf32>
    %c0_9 = arith.constant 0 : index
    %c0_10 = arith.constant 0 : index
    %11 = vector.load %arg5[%c0_9, %c0_10] : memref<1x10xf32, #tpu.memory_space<vmem>>, vector<1x10xf32>
    %12 = vector.broadcast %11 : vector<1x10xf32> to vector<8x10xf32>
    %13 = arith.addf %10, %12 : vector<8x10xf32>
    %cst_11 = arith.constant 0.000000e+00 : f32
    %14 = vector.broadcast %cst_11 : f32 to vector<8x10xf32>
    %15 = arith.subf %14, %13 : vector<8x10xf32>
    %16 = math.exp %15 : vector<8x10xf32>
    %cst_12 = arith.constant 1.000000e+00 : f32
    %17 = vector.broadcast %cst_12 : f32 to vector<8x10xf32>
    %18 = arith.addf %17, %16 : vector<8x10xf32>
    %19 = tpu.reciprocal %18 {approx = true} : vector<8x10xf32> -> vector<8x10xf32>
    %c0_13 = arith.constant 0 : index
    %c0_14 = arith.constant 0 : index
    %20 = vector.load %arg6[%c0_13, %c0_14] : memref<8x10xf32, #tpu.memory_space<vmem>>, vector<8x10xf32>
    tpu.vector_store %arg6[%c0_13, %c0_14], %19 {strides = array<i32>} : memref<8x10xf32, #tpu.memory_space<vmem>>, vector<8x10xf32>,
    return
  }
  func.func @transform_0(%arg0: i32) -> (i32, i32) {
    %c0_i32 = arith.constant 0 : i32
    %c0_i32_0 = arith.constant 0 : i32
    return %arg0, %c0_i32 : i32, i32
  }
  func.func @transform_1(%arg0: i32) -> (i32, i32) {
    %c0_i32 = arith.constant 0 : i32
    %c0_i32_0 = arith.constant 0 : i32
    %c0_i32_1 = arith.constant 0 : i32
    return %c0_i32, %c0_i32_0 : i32, i32
  }
  func.func @transform_2(%arg0: i32) -> (i32, i32) {
    %c0_i32 = arith.constant 0 : i32
    %c0_i32_0 = arith.constant 0 : i32
    %c0_i32_1 = arith.constant 0 : i32
    return %c0_i32, %c0_i32_0 : i32, i32
  }
  func.func @transform_3(%arg0: i32) -> (i32, i32) {
    %c0_i32 = arith.constant 0 : i32
    %c0_i32_0 = arith.constant 0 : i32
    %c0_i32_1 = arith.constant 0 : i32
    return %c0_i32, %c0_i32_0 : i32, i32
  }
  func.func @transform_4(%arg0: i32) -> (i32, i32) {
    %c0_i32 = arith.constant 0 : i32
    %c0_i32_0 = arith.constant 0 : i32
    %c0_i32_1 = arith.constant 0 : i32
    return %c0_i32, %c0_i32_0 : i32, i32
  }
  func.func @transform_5(%arg0: i32) -> (i32, i32) {
    %c0_i32 = arith.constant 0 : i32
    %c0_i32_0 = arith.constant 0 : i32
    return %arg0, %c0_i32 : i32, i32
  }
}

</mosaic_0001>

<llo_original>
// kernel: tpu_custom_call.1
$region0: #{tpu_custom_call.1}
  #allocation0 [shape = 'u32[]', space=smem, size = 0x4, offset = 0x4, fixed_abs, tag = 'smem constant byte address 0x4 - core index']
  #allocation1 [shape = 'u32[144,128]{1,0:T(1,128)}', space=vmem, size = 0x12000, scoped, tag = 'internal scratch']
  %s0 = inlined_call_operand.vmem [shape: bf16[8,784], index: 0, kind: input, shape index: {}]
  %s1 = inlined_call_operand.hbm [shape: bf16[784,512], index: 1, kind: input, shape index: {}]
  %s2 = inlined_call_operand.vmem [shape: f32[1,512], index: 2, kind: input, shape index: {}]
  %s3 = inlined_call_operand.vmem [shape: bf16[512,10], index: 3, kind: input, shape index: {}]
  %s4 = inlined_call_operand.vmem [shape: f32[1,10], index: 4, kind: input, shape index: {}]
  %s5 = inlined_call_operand.hbm [shape: f32[8,10], index: 5, kind: output, shape index: {}]
  %s6 = sld [smem:[#allocation0]]
  $region34: #{tpu_custom_call.1} parent=0
    _
  %s8 = ssub.s32 1, %s6
  %s9 = scalar_select 0, %s8, %s6
  $region1: #{tpu_custom_call.1} parent=0
    #allocation2 [shape = 'u8[802816]{0}', space=vmem, size = 0xc4000, scoped, tag = 'input window, operand 1, single buffered']
    #allocation3 [shape = 's32[1]{0}', space=sflag, size = 0x4, scoped, tag = 'scoped memory for tpu_custom_call.1']
    #allocation4 [shape = 's32[1]{0}', space=sflag, size = 0x4, scoped, tag = 'scoped memory for tpu_custom_call.1']
    #allocation5 [shape = 'u8[4096]{0}', space=vmem, size = 0x1000, scoped, tag = 'output window, operand 0, single buffered']
    %10 = vsyncpa [#allocation3], 0
    %11 = vsyncpa [#allocation4], 0
    // Predicated region
    $region2: #{tpu_custom_call.1} parent=1 // pred_check
      _
    $region3: #{tpu_custom_call.1} parent=1 // pred_check_branch
      %13 = sbr.rel (0) target = $region5
    $region4: #{tpu_custom_call.1} parent=1 // pred_region
      _
    $region5: #{tpu_custom_call.1} parent=1 // pred_fallthru
      _
    // Predicated region
    $region6: #{tpu_custom_call.1} parent=1 // pred_check
      _
    $region7: #{tpu_custom_call.1} parent=1 // pred_check_branch
      %15 = sbr.rel (0) target = $region9
    $region8: #{tpu_custom_call.1} parent=1 // pred_region
      %s17 = ssub.s32 25088, 25088
      %18 = vsyncadd [#allocation3], %s17
      %s19 = sshll.u32 [#allocation2], 4
      %s20 = int_to_ptr.vmem [resolvable:$true] %s19
      %25 = dma.hbm_to_vmem [thread:$0]  %s1, 25088, %s20, [#allocation3], 256, 256, 16
    $region9: #{tpu_custom_call.1} parent=1 // pred_fallthru
      _
    // Predicated region
    $region10: #{tpu_custom_call.1} parent=1 // pred_check
      _
    $region11: #{tpu_custom_call.1} parent=1 // pred_check_branch
      %27 = sbr.rel (0) target = $region13
    $region12: #{tpu_custom_call.1} parent=1 // pred_region
      _
    $region13: #{tpu_custom_call.1} parent=1 // pred_fallthru
      _
    // Predicated region
    $region14: #{tpu_custom_call.1} parent=1 // pred_check
      _
    $region15: #{tpu_custom_call.1} parent=1 // pred_check_branch
      %29 = sbr.rel (0) target = $region17
    $region16: #{tpu_custom_call.1} parent=1 // pred_region
      _
    $region17: #{tpu_custom_call.1} parent=1 // pred_fallthru
      _
    // Predicated region
    $region18: #{tpu_custom_call.1} parent=1 // pred_check
      _
    $region19: #{tpu_custom_call.1} parent=1 // pred_check_branch
      %31 = sbr.rel (0) target = $region21
    $region20: #{tpu_custom_call.1} parent=1 // pred_region
      _
    $region21: #{tpu_custom_call.1} parent=1 // pred_fallthru
      _
    // Predicated region
    $region22: #{tpu_custom_call.1} parent=1 // pred_check
      _
    $region23: #{tpu_custom_call.1} parent=1 // pred_check_branch
      %33 = sbr.rel (0) target = $region25
    $region24: #{tpu_custom_call.1} parent=1 // pred_region
      %34 = dma.done [#allocation3], 25088
    $region25: #{tpu_custom_call.1} parent=1 // pred_fallthru
      _
    %v36 = vld [vmem:[%s0] sm:$0xff]
    %v37 = vld [vmem:[%s0 + $0x8] sm:$0xff]
    %v38 = vld [vmem:[%s0 + $0x10] sm:$0xff]
    %v39 = vld [vmem:[%s0 + $0x18] sm:$0xf]
    %v40 = vld [vmem:[#allocation2] sm:$0xff]
    %v41 = vld [vmem:[#allocation2 + $0x8] sm:$0xff]
    %v42 = vld [vmem:[#allocation2 + $0x10] sm:$0xff]
    %v43 = vld [vmem:[#allocation2 + $0x18] sm:$0xff]
    %v44 = vld [vmem:[#allocation2 + $0x20] sm:$0xff]
    %v45 = vld [vmem:[#allocation2 + $0x28] sm:$0xff]
    %v46 = vld [vmem:[#allocation2 + $0x30] sm:$0xff]
    %v47 = vld [vmem:[#allocation2 + $0x38] sm:$0xff]
    %v48 = vld [vmem:[#allocation2 + $0x40] sm:$0xff]
    %v49 = vld [vmem:[#allocation2 + $0x48] sm:$0xff]
    %v50 = vld [vmem:[#allocation2 + $0x50] sm:$0xff]
    %v51 = vld [vmem:[#allocation2 + $0x58] sm:$0xff]
    %v52 = vld [vmem:[#allocation2 + $0x60] sm:$0xff]
    %v53 = vld [vmem:[#allocation2 + $0x68] sm:$0xff]
    %v54 = vld [vmem:[#allocation2 + $0x70] sm:$0xff]
    %v55 = vld [vmem:[#allocation2 + $0x78] sm:$0xff]
    %v56 = vld [vmem:[#allocation2 + $0x80] sm:$0xff]
    %v57 = vld [vmem:[#allocation2 + $0x88] sm:$0xff]
    %v58 = vld [vmem:[#allocation2 + $0x90] sm:$0xff]
    %v59 = vld [vmem:[#allocation2 + $0x98] sm:$0xff]
    %v60 = vld [vmem:[#allocation2 + $0xa0] sm:$0xff]
    %v61 = vld [vmem:[#allocation2 + $0xa8] sm:$0xff]
    %v62 = vld [vmem:[#allocation2 + $0xb0] sm:$0xff]
    %v63 = vld [vmem:[#allocation2 + $0xb8] sm:$0xff]
    %v64 = vld [vmem:[#allocation2 + $0xc0] sm:$0xff]
    %v65 = vld [vmem:[#allocation2 + $0xc8] sm:$0xff]
    %v66 = vld [vmem:[#allocation2 + $0xd0] sm:$0xff]
    %v67 = vld [vmem:[#allocation2 + $0xd8] sm:$0xff]
    %v68 = vld [vmem:[#allocation2 + $0xe0] sm:$0xff]
    %v69 = vld [vmem:[#allocation2 + $0xe8] sm:$0xff]
    %v70 = vld [vmem:[#allocation2 + $0xf0] sm:$0xff]
    %v71 = vld [vmem:[#allocation2 + $0xf8] sm:$0xff]
    %v72 = vld [vmem:[#allocation2 + $0x100] sm:$0xff]
    %v73 = vld [vmem:[#allocation2 + $0x108] sm:$0xff]
    %v74 = vld [vmem:[#allocation2 + $0x110] sm:$0xff]
    %v75 = vld [vmem:[#allocation2 + $0x118] sm:$0xff]
    %v76 = vld [vmem:[#allocation2 + $0x120] sm:$0xff]
    %v77 = vld [vmem:[#allocation2 + $0x128] sm:$0xff]
    %v78 = vld [vmem:[#allocation2 + $0x130] sm:$0xff]
    %v79 = vld [vmem:[#allocation2 + $0x138] sm:$0xff]
    %v80 = vld [vmem:[#allocation2 + $0x140] sm:$0xff]
    %v81 = vld [vmem:[#allocation2 + $0x148] sm:$0xff]
    %v82 = vld [vmem:[#allocation2 + $0x150] sm:$0xff]
    %v83 = vld [vmem:[#allocation2 + $0x158] sm:$0xff]
    %v84 = vld [vmem:[#allocation2 + $0x160] sm:$0xff]
    %v85 = vld [vmem:[#allocation2 + $0x168] sm:$0xff]
    %v86 = vld [vmem:[#allocation2 + $0x170] sm:$0xff]
    %v87 = vld [vmem:[#allocation2 + $0x178] sm:$0xff]
    %v88 = vld [vmem:[#allocation2 + $0x180] sm:$0xff]
    %v89 = vld [vmem:[#allocation2 + $0x188] sm:$0xff]
    %v90 = vld [vmem:[#allocation2 + $0x190] sm:$0xff]
    %v91 = vld [vmem:[#allocation2 + $0x198] sm:$0xff]
    %v92 = vld [vmem:[#allocation2 + $0x1a0] sm:$0xff]
    %v93 = vld [vmem:[#allocation2 + $0x1a8] sm:$0xff]
    %v94 = vld [vmem:[#allocation2 + $0x1b0] sm:$0xff]
    %v95 = vld [vmem:[#allocation2 + $0x1b8] sm:$0xff]
    %v96 = vld [vmem:[#allocation2 + $0x1c0] sm:$0xff]
    %v97 = vld [vmem:[#allocation2 + $0x1c8] sm:$0xff]
    %v98 = vld [vmem:[#allocation2 + $0x1d0] sm:$0xff]
    %v99 = vld [vmem:[#allocation2 + $0x1d8] sm:$0xff]
    %v100 = vld [vmem:[#allocation2 + $0x1e0] sm:$0xff]
    %v101 = vld [vmem:[#allocation2 + $0x1e8] sm:$0xff]
    %v102 = vld [vmem:[#allocation2 + $0x1f0] sm:$0xff]
    %v103 = vld [vmem:[#allocation2 + $0x1f8] sm:$0xff]
    %v104 = vld [vmem:[#allocation2 + $0x200] sm:$0xff]
    %v105 = vld [vmem:[#allocation2 + $0x208] sm:$0xff]
    %v106 = vld [vmem:[#allocation2 + $0x210] sm:$0xff]
    %v107 = vld [vmem:[#allocation2 + $0x218] sm:$0xff]
    %v108 = vld [vmem:[#allocation2 + $0x220] sm:$0xff]
    %v109 = vld [vmem:[#allocation2 + $0x228] sm:$0xff]
    %v110 = vld [vmem:[#allocation2 + $0x230] sm:$0xff]
    %v111 = vld [vmem:[#allocation2 + $0x238] sm:$0xff]
    %v112 = vld [vmem:[#allocation2 + $0x240] sm:$0xff]
    %v113 = vld [vmem:[#allocation2 + $0x248] sm:$0xff]
    %v114 = vld [vmem:[#allocation2 + $0x250] sm:$0xff]
    %v115 = vld [vmem:[#allocation2 + $0x258] sm:$0xff]
    %v116 = vld [vmem:[#allocation2 + $0x260] sm:$0xff]
    %v117 = vld [vmem:[#allocation2 + $0x268] sm:$0xff]
    %v118 = vld [vmem:[#allocation2 + $0x270] sm:$0xff]
    %v119 = vld [vmem:[#allocation2 + $0x278] sm:$0xff]
    %v120 = vld [vmem:[#allocation2 + $0x280] sm:$0xff]
    %v121 = vld [vmem:[#allocation2 + $0x288] sm:$0xff]
    %v122 = vld [vmem:[#allocation2 + $0x290] sm:$0xff]
    %v123 = vld [vmem:[#allocation2 + $0x298] sm:$0xff]
    %v124 = vld [vmem:[#allocation2 + $0x2a0] sm:$0xff]
    %v125 = vld [vmem:[#allocation2 + $0x2a8] sm:$0xff]
    %v126 = vld [vmem:[#allocation2 + $0x2b0] sm:$0xff]
    %v127 = vld [vmem:[#allocation2 + $0x2b8] sm:$0xff]
    %v128 = vld [vmem:[#allocation2 + $0x2c0] sm:$0xff]
    %v129 = vld [vmem:[#allocation2 + $0x2c8] sm:$0xff]
    %v130 = vld [vmem:[#allocation2 + $0x2d0] sm:$0xff]
    %v131 = vld [vmem:[#allocation2 + $0x2d8] sm:$0xff]
    %v132 = vld [vmem:[#allocation2 + $0x2e0] sm:$0xff]
    %v133 = vld [vmem:[#allocation2 + $0x2e8] sm:$0xff]
    %v134 = vld [vmem:[#allocation2 + $0x2f0] sm:$0xff]
    %v135 = vld [vmem:[#allocation2 + $0x2f8] sm:$0xff]
    %v136 = vld [vmem:[#allocation2 + $0x300] sm:$0xff]
    %v137 = vld [vmem:[#allocation2 + $0x308] sm:$0xff]
    %v138 = vld [vmem:[#allocation2 + $0x310] sm:$0xff]
    %v139 = vld [vmem:[#allocation2 + $0x318] sm:$0xff]
    %v140 = vld [vmem:[#allocation2 + $0x320] sm:$0xff]
    %v141 = vld [vmem:[#allocation2 + $0x328] sm:$0xff]
    %v142 = vld [vmem:[#allocation2 + $0x330] sm:$0xff]
    %v143 = vld [vmem:[#allocation2 + $0x338] sm:$0xff]
    %v144 = vld [vmem:[#allocation2 + $0x340] sm:$0xff]
    %v145 = vld [vmem:[#allocation2 + $0x348] sm:$0xff]
    %v146 = vld [vmem:[#allocation2 + $0x350] sm:$0xff]
    %v147 = vld [vmem:[#allocation2 + $0x358] sm:$0xff]
    %v148 = vld [vmem:[#allocation2 + $0x360] sm:$0xff]
    %v149 = vld [vmem:[#allocation2 + $0x368] sm:$0xff]
    %v150 = vld [vmem:[#allocation2 + $0x370] sm:$0xff]
    %v151 = vld [vmem:[#allocation2 + $0x378] sm:$0xff]
    %v152 = vld [vmem:[#allocation2 + $0x380] sm:$0xff]
    %v153 = vld [vmem:[#allocation2 + $0x388] sm:$0xff]
    %v154 = vld [vmem:[#allocation2 + $0x390] sm:$0xff]
    %v155 = vld [vmem:[#allocation2 + $0x398] sm:$0xff]
    %v156 = vld [vmem:[#allocation2 + $0x3a0] sm:$0xff]
    %v157 = vld [vmem:[#allocation2 + $0x3a8] sm:$0xff]
    %v158 = vld [vmem:[#allocation2 + $0x3b0] sm:$0xff]
    %v159 = vld [vmem:[#allocation2 + $0x3b8] sm:$0xff]
    %v160 = vld [vmem:[#allocation2 + $0x3c0] sm:$0xff]
    %v161 = vld [vmem:[#allocation2 + $0x3c8] sm:$0xff]
    %v162 = vld [vmem:[#allocation2 + $0x3d0] sm:$0xff]
    %v163 = vld [vmem:[#allocation2 + $0x3d8] sm:$0xff]
    %v164 = vld [vmem:[#allocation2 + $0x3e0] sm:$0xff]
    %v165 = vld [vmem:[#allocation2 + $0x3e8] sm:$0xff]
    %v166 = vld [vmem:[#allocation2 + $0x3f0] sm:$0xff]
    %v167 = vld [vmem:[#allocation2 + $0x3f8] sm:$0xff]
    %v168 = vld [vmem:[#allocation2 + $0x400] sm:$0xff]
    %v169 = vld [vmem:[#allocation2 + $0x408] sm:$0xff]
    %v170 = vld [vmem:[#allocation2 + $0x410] sm:$0xff]
    %v171 = vld [vmem:[#allocation2 + $0x418] sm:$0xff]
    %v172 = vld [vmem:[#allocation2 + $0x420] sm:$0xff]
    %v173 = vld [vmem:[#allocation2 + $0x428] sm:$0xff]
    %v174 = vld [vmem:[#allocation2 + $0x430] sm:$0xff]
    %v175 = vld [vmem:[#allocation2 + $0x438] sm:$0xff]
    %v176 = vld [vmem:[#allocation2 + $0x440] sm:$0xff]
    %v177 = vld [vmem:[#allocation2 + $0x448] sm:$0xff]
    %v178 = vld [vmem:[#allocation2 + $0x450] sm:$0xff]
    %v179 = vld [vmem:[#allocation2 + $0x458] sm:$0xff]
    %v180 = vld [vmem:[#allocation2 + $0x460] sm:$0xff]
    %v181 = vld [vmem:[#allocation2 + $0x468] sm:$0xff]
    %v182 = vld [vmem:[#allocation2 + $0x470] sm:$0xff]
    %v183 = vld [vmem:[#allocation2 + $0x478] sm:$0xff]
    %v184 = vld [vmem:[#allocation2 + $0x480] sm:$0xff]
    %v185 = vld [vmem:[#allocation2 + $0x488] sm:$0xff]
    %v186 = vld [vmem:[#allocation2 + $0x490] sm:$0xff]
    %v187 = vld [vmem:[#allocation2 + $0x498] sm:$0xff]
    %v188 = vld [vmem:[#allocation2 + $0x4a0] sm:$0xff]
    %v189 = vld [vmem:[#allocation2 + $0x4a8] sm:$0xff]
    %v190 = vld [vmem:[#allocation2 + $0x4b0] sm:$0xff]
    %v191 = vld [vmem:[#allocation2 + $0x4b8] sm:$0xff]
    %v192 = vld [vmem:[#allocation2 + $0x4c0] sm:$0xff]
    %v193 = vld [vmem:[#allocation2 + $0x4c8] sm:$0xff]
    %v194 = vld [vmem:[#allocation2 + $0x4d0] sm:$0xff]
    %v195 = vld [vmem:[#allocation2 + $0x4d8] sm:$0xff]
    %v196 = vld [vmem:[#allocation2 + $0x4e0] sm:$0xff]
    %v197 = vld [vmem:[#allocation2 + $0x4e8] sm:$0xff]
    %v198 = vld [vmem:[#allocation2 + $0x4f0] sm:$0xff]
    %v199 = vld [vmem:[#allocation2 + $0x4f8] sm:$0xff]
    %v200 = vld [vmem:[#allocation2 + $0x500] sm:$0xff]
    %v201 = vld [vmem:[#allocation2 + $0x508] sm:$0xff]
    %v202 = vld [vmem:[#allocation2 + $0x510] sm:$0xff]
    %v203 = vld [vmem:[#allocation2 + $0x518] sm:$0xff]
    %v204 = vld [vmem:[#allocation2 + $0x520] sm:$0xff]
    %v205 = vld [vmem:[#allocation2 + $0x528] sm:$0xff]
    %v206 = vld [vmem:[#allocation2 + $0x530] sm:$0xff]
    %v207 = vld [vmem:[#allocation2 + $0x538] sm:$0xff]
    %v208 = vld [vmem:[#allocation2 + $0x540] sm:$0xff]
    %v209 = vld [vmem:[#allocation2 + $0x548] sm:$0xff]
    %v210 = vld [vmem:[#allocation2 + $0x550] sm:$0xff]
    %v211 = vld [vmem:[#allocation2 + $0x558] sm:$0xff]
    %v212 = vld [vmem:[#allocation2 + $0x560] sm:$0xff]
    %v213 = vld [vmem:[#allocation2 + $0x568] sm:$0xff]
    %v214 = vld [vmem:[#allocation2 + $0x570] sm:$0xff]
    %v215 = vld [vmem:[#allocation2 + $0x578] sm:$0xff]
    %v216 = vld [vmem:[#allocation2 + $0x580] sm:$0xff]
    %v217 = vld [vmem:[#allocation2 + $0x588] sm:$0xff]
    %v218 = vld [vmem:[#allocation2 + $0x590] sm:$0xff]
    %v219 = vld [vmem:[#allocation2 + $0x598] sm:$0xff]
    %v220 = vld [vmem:[#allocation2 + $0x5a0] sm:$0xff]
    %v221 = vld [vmem:[#allocation2 + $0x5a8] sm:$0xff]
    %v222 = vld [vmem:[#allocation2 + $0x5b0] sm:$0xff]
    %v223 = vld [vmem:[#allocation2 + $0x5b8] sm:$0xff]
    %v224 = vld [vmem:[#allocation2 + $0x5c0] sm:$0xff]
    %v225 = vld [vmem:[#allocation2 + $0x5c8] sm:$0xff]
    %v226 = vld [vmem:[#allocation2 + $0x5d0] sm:$0xff]
    %v227 = vld [vmem:[#allocation2 + $0x5d8] sm:$0xff]
    %v228 = vld [vmem:[#allocation2 + $0x5e0] sm:$0xff]
    %v229 = vld [vmem:[#allocation2 + $0x5e8] sm:$0xff]
    %v230 = vld [vmem:[#allocation2 + $0x5f0] sm:$0xff]
    %v231 = vld [vmem:[#allocation2 + $0x5f8] sm:$0xff]
    %v232 = vld [vmem:[#allocation2 + $0x600] sm:$0xff]
    %v233 = vld [vmem:[#allocation2 + $0x608] sm:$0xff]
    %v234 = vld [vmem:[#allocation2 + $0x610] sm:$0xff]
    %v235 = vld [vmem:[#allocation2 + $0x618] sm:$0xff]
    %v236 = vld [vmem:[%s2] sm:$0xf]
    %v238 = vlaneseq
    %v239 = vshrl.u32 %v238, 7
    %v240 = vsub.s32 0, %v239
    %v241 = vrot.slane %v236, %v240
    %v242 = vlaneseq
    %v243 = vshrl.u32 %v242, 7
    %v244 = vsub.s32 1, %v243
    %v245 = vrot.slane %v236, %v244
    %v246 = vlaneseq
    %v247 = vshrl.u32 %v246, 7
    %v248 = vsub.s32 2, %v247
    %v249 = vrot.slane %v236, %v248
    %v250 = vlaneseq
    %v251 = vshrl.u32 %v250, 7
    %v252 = vsub.s32 3, %v251
    %v253 = vrot.slane %v236, %v252
    %v262 = vunpack.c.l.b16 %v36
    %v263 = vunpack.c.h.b16 %v36
    %v264 = vunpack.c.l.b16 %v37
    %v265 = vunpack.c.h.b16 %v37
    %v266 = vunpack.c.l.b16 %v38
    %v267 = vunpack.c.h.b16 %v38
    %v268 = vunpack.c.l.b16 %v39
    %v269 = vpack.c.b16 %v262, %v262
    %v270 = vpack.c.b16 %v263, %v263
    %v271 = vpack.c.b16 %v264, %v264
    %v272 = vpack.c.b16 %v265, %v265
    %v273 = vpack.c.b16 %v266, %v266
    %v274 = vpack.c.b16 %v267, %v267
    %v275 = vpack.c.b16 %v268, %v268
    %v478 = vunpack.c.l.b16 %v40
    %v479 = vunpack.c.h.b16 %v40
    %v480 = vunpack.c.l.b16 %v41
    %v481 = vunpack.c.h.b16 %v41
    %v482 = vunpack.c.l.b16 %v42
    %v483 = vunpack.c.h.b16 %v42
    %v484 = vunpack.c.l.b16 %v43
    %v485 = vunpack.c.h.b16 %v43
    %v486 = vunpack.c.l.b16 %v44
    %v487 = vunpack.c.h.b16 %v44
    %v488 = vunpack.c.l.b16 %v45
    %v489 = vunpack.c.h.b16 %v45
    %v490 = vunpack.c.l.b16 %v46
    %v491 = vunpack.c.h.b16 %v46
    %v492 = vunpack.c.l.b16 %v47
    %v493 = vunpack.c.h.b16 %v47
    %v494 = vunpack.c.l.b16 %v48
    %v495 = vunpack.c.h.b16 %v48
    %v496 = vunpack.c.l.b16 %v49
    %v497 = vunpack.c.h.b16 %v49
    %v498 = vunpack.c.l.b16 %v50
    %v499 = vunpack.c.h.b16 %v50
    %v500 = vunpack.c.l.b16 %v51
    %v501 = vunpack.c.h.b16 %v51
    %v502 = vunpack.c.l.b16 %v52
    %v503 = vunpack.c.h.b16 %v52
    %v504 = vunpack.c.l.b16 %v53
    %v505 = vunpack.c.h.b16 %v53
    %v506 = vunpack.c.l.b16 %v54
    %v507 = vunpack.c.h.b16 %v54
    %v508 = vunpack.c.l.b16 %v55
    %v509 = vunpack.c.h.b16 %v55
    %v510 = vunpack.c.l.b16 %v56
    %v511 = vunpack.c.h.b16 %v56
    %v512 = vunpack.c.l.b16 %v57
    %v513 = vunpack.c.h.b16 %v57
    %v514 = vunpack.c.l.b16 %v58
    %v515 = vunpack.c.h.b16 %v58
    %v516 = vunpack.c.l.b16 %v59
    %v517 = vunpack.c.h.b16 %v59
    %v518 = vunpack.c.l.b16 %v60
    %v519 = vunpack.c.h.b16 %v60
    %v520 = vunpack.c.l.b16 %v61
    %v521 = vunpack.c.h.b16 %v61
    %v522 = vunpack.c.l.b16 %v62
    %v523 = vunpack.c.h.b16 %v62
    %v524 = vunpack.c.l.b16 %v63
    %v525 = vunpack.c.h.b16 %v63
    %v526 = vunpack.c.l.b16 %v64
    %v527 = vunpack.c.h.b16 %v64
    %v528 = vunpack.c.l.b16 %v65
    %v529 = vunpack.c.h.b16 %v65
    %v530 = vunpack.c.l.b16 %v66
    %v531 = vunpack.c.h.b16 %v66
    %v532 = vunpack.c.l.b16 %v67
    %v533 = vunpack.c.h.b16 %v67
    %v534 = vunpack.c.l.b16 %v68
    %v535 = vunpack.c.h.b16 %v68
    %v536 = vunpack.c.l.b16 %v69
    %v537 = vunpack.c.h.b16 %v69
    %v538 = vunpack.c.l.b16 %v70
    %v539 = vunpack.c.h.b16 %v70
    %v540 = vunpack.c.l.b16 %v71
    %v541 = vunpack.c.h.b16 %v71
    %v542 = vunpack.c.l.b16 %v72
    %v543 = vunpack.c.h.b16 %v72
    %v544 = vunpack.c.l.b16 %v73
    %v545 = vunpack.c.h.b16 %v73
    %v546 = vunpack.c.l.b16 %v74
    %v547 = vunpack.c.h.b16 %v74
    %v548 = vunpack.c.l.b16 %v75
    %v549 = vunpack.c.h.b16 %v75
    %v550 = vunpack.c.l.b16 %v76
    %v551 = vunpack.c.h.b16 %v76
    %v552 = vunpack.c.l.b16 %v77
    %v553 = vunpack.c.h.b16 %v77
    %v554 = vunpack.c.l.b16 %v78
    %v555 = vunpack.c.h.b16 %v78
    %v556 = vunpack.c.l.b16 %v79
    %v557 = vunpack.c.h.b16 %v79
    %v558 = vunpack.c.l.b16 %v80
    %v559 = vunpack.c.h.b16 %v80
    %v560 = vunpack.c.l.b16 %v81
    %v561 = vunpack.c.h.b16 %v81
    %v562 = vunpack.c.l.b16 %v82
    %v563 = vunpack.c.h.b16 %v82
    %v564 = vunpack.c.l.b16 %v83
    %v565 = vunpack.c.h.b16 %v83
    %v566 = vunpack.c.l.b16 %v84
    %v567 = vunpack.c.h.b16 %v84
    %v568 = vunpack.c.l.b16 %v85
    %v569 = vunpack.c.h.b16 %v85
    %v570 = vunpack.c.l.b16 %v86
    %v571 = vunpack.c.h.b16 %v86
    %v572 = vunpack.c.l.b16 %v87
    %v573 = vunpack.c.h.b16 %v87
    %v574 = vunpack.c.l.b16 %v88
    %v575 = vunpack.c.h.b16 %v88
    %v576 = vunpack.c.l.b16 %v89
    %v577 = vunpack.c.h.b16 %v89
    %v578 = vunpack.c.l.b16 %v90
    %v579 = vunpack.c.h.b16 %v90
    %v580 = vunpack.c.l.b16 %v91
    %v581 = vunpack.c.h.b16 %v91
    %v582 = vunpack.c.l.b16 %v92
    %v583 = vunpack.c.h.b16 %v92
    %v584 = vunpack.c.l.b16 %v93
    %v585 = vunpack.c.h.b16 %v93
    %v586 = vunpack.c.l.b16 %v94
    %v587 = vunpack.c.h.b16 %v94
    %v588 = vunpack.c.l.b16 %v95
    %v589 = vunpack.c.h.b16 %v95
    %v590 = vunpack.c.l.b16 %v96
    %v591 = vunpack.c.h.b16 %v96
    %v592 = vunpack.c.l.b16 %v97
    %v593 = vunpack.c.h.b16 %v97
    %v594 = vunpack.c.l.b16 %v98
    %v595 = vunpack.c.h.b16 %v98
    %v596 = vunpack.c.l.b16 %v99
    %v597 = vunpack.c.h.b16 %v99
    %v598 = vunpack.c.l.b16 %v100
    %v599 = vunpack.c.h.b16 %v100
    %v600 = vunpack.c.l.b16 %v101
    %v601 = vunpack.c.h.b16 %v101
    %v602 = vunpack.c.l.b16 %v102
    %v603 = vunpack.c.h.b16 %v102
    %v604 = vunpack.c.l.b16 %v103
    %v605 = vunpack.c.h.b16 %v103
    %v606 = vunpack.c.l.b16 %v104
    %v607 = vunpack.c.h.b16 %v104
    %v608 = vunpack.c.l.b16 %v105
    %v609 = vunpack.c.h.b16 %v105
    %v610 = vunpack.c.l.b16 %v106
    %v611 = vunpack.c.h.b16 %v106
    %v612 = vunpack.c.l.b16 %v107
    %v613 = vunpack.c.h.b16 %v107
    %v614 = vunpack.c.l.b16 %v108
    %v615 = vunpack.c.h.b16 %v108
    %v616 = vunpack.c.l.b16 %v109
    %v617 = vunpack.c.h.b16 %v109
    %v618 = vunpack.c.l.b16 %v110
    %v619 = vunpack.c.h.b16 %v110
    %v620 = vunpack.c.l.b16 %v111
    %v621 = vunpack.c.h.b16 %v111
    %v622 = vunpack.c.l.b16 %v112
    %v623 = vunpack.c.h.b16 %v112
    %v624 = vunpack.c.l.b16 %v113
    %v625 = vunpack.c.h.b16 %v113
    %v626 = vunpack.c.l.b16 %v114
    %v627 = vunpack.c.h.b16 %v114
    %v628 = vunpack.c.l.b16 %v115
    %v629 = vunpack.c.h.b16 %v115
    %v630 = vunpack.c.l.b16 %v116
    %v631 = vunpack.c.h.b16 %v116
    %v632 = vunpack.c.l.b16 %v117
    %v633 = vunpack.c.h.b16 %v117
    %v634 = vunpack.c.l.b16 %v118
    %v635 = vunpack.c.h.b16 %v118
    %v636 = vunpack.c.l.b16 %v119
    %v637 = vunpack.c.h.b16 %v119
    %v638 = vunpack.c.l.b16 %v120
    %v639 = vunpack.c.h.b16 %v120
    %v640 = vunpack.c.l.b16 %v121
    %v641 = vunpack.c.h.b16 %v121
    %v642 = vunpack.c.l.b16 %v122
    %v643 = vunpack.c.h.b16 %v122
    %v644 = vunpack.c.l.b16 %v123
    %v645 = vunpack.c.h.b16 %v123
    %v646 = vunpack.c.l.b16 %v124
    %v647 = vunpack.c.h.b16 %v124
    %v648 = vunpack.c.l.b16 %v125
    %v649 = vunpack.c.h.b16 %v125
    %v650 = vunpack.c.l.b16 %v126
    %v651 = vunpack.c.h.b16 %v126
    %v652 = vunpack.c.l.b16 %v127
    %v653 = vunpack.c.h.b16 %v127
    %v654 = vunpack.c.l.b16 %v128
    %v655 = vunpack.c.h.b16 %v128
    %v656 = vunpack.c.l.b16 %v129
    %v657 = vunpack.c.h.b16 %v129
    %v658 = vunpack.c.l.b16 %v130
    %v659 = vunpack.c.h.b16 %v130
    %v660 = vunpack.c.l.b16 %v131
    %v661 = vunpack.c.h.b16 %v131
    %v662 = vunpack.c.l.b16 %v132
    %v663 = vunpack.c.h.b16 %v132
    %v664 = vunpack.c.l.b16 %v133
    %v665 = vunpack.c.h.b16 %v133
    %v666 = vunpack.c.l.b16 %v134
    %v667 = vunpack.c.h.b16 %v134
    %v668 = vunpack.c.l.b16 %v135
    %v669 = vunpack.c.h.b16 %v135
    %v670 = vunpack.c.l.b16 %v136
    %v671 = vunpack.c.h.b16 %v136
    %v672 = vunpack.c.l.b16 %v137
    %v673 = vunpack.c.h.b16 %v137
    %v674 = vunpack.c.l.b16 %v138
    %v675 = vunpack.c.h.b16 %v138
    %v676 = vunpack.c.l.b16 %v139
    %v677 = vunpack.c.h.b16 %v139
    %v678 = vunpack.c.l.b16 %v140
    %v679 = vunpack.c.h.b16 %v140
    %v680 = vunpack.c.l.b16 %v141
    %v681 = vunpack.c.h.b16 %v141
    %v682 = vunpack.c.l.b16 %v142
    %v683 = vunpack.c.h.b16 %v142
    %v684 = vunpack.c.l.b16 %v143
    %v685 = vunpack.c.h.b16 %v143
    %v686 = vunpack.c.l.b16 %v144
    %v687 = vunpack.c.h.b16 %v144
    %v688 = vunpack.c.l.b16 %v145
    %v689 = vunpack.c.h.b16 %v145
    %v690 = vunpack.c.l.b16 %v146
    %v691 = vunpack.c.h.b16 %v146
    %v692 = vunpack.c.l.b16 %v147
    %v693 = vunpack.c.h.b16 %v147
    %v694 = vunpack.c.l.b16 %v148
    %v695 = vunpack.c.h.b16 %v148
    %v696 = vunpack.c.l.b16 %v149
    %v697 = vunpack.c.h.b16 %v149
    %v698 = vunpack.c.l.b16 %v150
    %v699 = vunpack.c.h.b16 %v150
    %v700 = vunpack.c.l.b16 %v151
    %v701 = vunpack.c.h.b16 %v151
    %v702 = vunpack.c.l.b16 %v152
    %v703 = vunpack.c.h.b16 %v152
    %v704 = vunpack.c.l.b16 %v153
    %v705 = vunpack.c.h.b16 %v153
    %v706 = vunpack.c.l.b16 %v154
    %v707 = vunpack.c.h.b16 %v154
    %v708 = vunpack.c.l.b16 %v155
    %v709 = vunpack.c.h.b16 %v155
    %v710 = vunpack.c.l.b16 %v156
    %v711 = vunpack.c.h.b16 %v156
    %v712 = vunpack.c.l.b16 %v157
    %v713 = vunpack.c.h.b16 %v157
    %v714 = vunpack.c.l.b16 %v158
    %v715 = vunpack.c.h.b16 %v158
    %v716 = vunpack.c.l.b16 %v159
    %v717 = vunpack.c.h.b16 %v159
    %v718 = vunpack.c.l.b16 %v160
    %v719 = vunpack.c.h.b16 %v160
    %v720 = vunpack.c.l.b16 %v161
    %v721 = vunpack.c.h.b16 %v161
    %v722 = vunpack.c.l.b16 %v162
    %v723 = vunpack.c.h.b16 %v162
    %v724 = vunpack.c.l.b16 %v163
    %v725 = vunpack.c.h.b16 %v163
    %v726 = vunpack.c.l.b16 %v164
    %v727 = vunpack.c.h.b16 %v164
    %v728 = vunpack.c.l.b16 %v165
    %v729 = vunpack.c.h.b16 %v165
    %v730 = vunpack.c.l.b16 %v166
    %v731 = vunpack.c.h.b16 %v166
    %v732 = vunpack.c.l.b16 %v167
    %v733 = vunpack.c.h.b16 %v167
    %v734 = vunpack.c.l.b16 %v168
    %v735 = vunpack.c.h.b16 %v168
    %v736 = vunpack.c.l.b16 %v169
    %v737 = vunpack.c.h.b16 %v169
    %v738 = vunpack.c.l.b16 %v170
    %v739 = vunpack.c.h.b16 %v170
    %v740 = vunpack.c.l.b16 %v171
    %v741 = vunpack.c.h.b16 %v171
    %v742 = vunpack.c.l.b16 %v172
    %v743 = vunpack.c.h.b16 %v172
    %v744 = vunpack.c.l.b16 %v173
    %v745 = vunpack.c.h.b16 %v173
    %v746 = vunpack.c.l.b16 %v174
    %v747 = vunpack.c.h.b16 %v174
    %v748 = vunpack.c.l.b16 %v175
    %v749 = vunpack.c.h.b16 %v175
    %v750 = vunpack.c.l.b16 %v176
    %v751 = vunpack.c.h.b16 %v176
    %v752 = vunpack.c.l.b16 %v177
    %v753 = vunpack.c.h.b16 %v177
    %v754 = vunpack.c.l.b16 %v178
    %v755 = vunpack.c.h.b16 %v178
    %v756 = vunpack.c.l.b16 %v179
    %v757 = vunpack.c.h.b16 %v179
    %v758 = vunpack.c.l.b16 %v180
    %v759 = vunpack.c.h.b16 %v180
    %v760 = vunpack.c.l.b16 %v181
    %v761 = vunpack.c.h.b16 %v181
    %v762 = vunpack.c.l.b16 %v182
    %v763 = vunpack.c.h.b16 %v182
    %v764 = vunpack.c.l.b16 %v183
    %v765 = vunpack.c.h.b16 %v183
    %v766 = vunpack.c.l.b16 %v184
    %v767 = vunpack.c.h.b16 %v184
    %v768 = vunpack.c.l.b16 %v185
    %v769 = vunpack.c.h.b16 %v185
    %v770 = vunpack.c.l.b16 %v186
    %v771 = vunpack.c.h.b16 %v186
    %v772 = vunpack.c.l.b16 %v187
    %v773 = vunpack.c.h.b16 %v187
    %v774 = vunpack.c.l.b16 %v188
    %v775 = vunpack.c.h.b16 %v188
    %v776 = vunpack.c.l.b16 %v189
    %v777 = vunpack.c.h.b16 %v189
    %v778 = vunpack.c.l.b16 %v190
    %v779 = vunpack.c.h.b16 %v190
    %v780 = vunpack.c.l.b16 %v191
    %v781 = vunpack.c.h.b16 %v191
    %v782 = vunpack.c.l.b16 %v192
    %v783 = vunpack.c.h.b16 %v192
    %v784 = vunpack.c.l.b16 %v193
    %v785 = vunpack.c.h.b16 %v193
    %v786 = vunpack.c.l.b16 %v194
    %v787 = vunpack.c.h.b16 %v194
    %v788 = vunpack.c.l.b16 %v195
    %v789 = vunpack.c.h.b16 %v195
    %v790 = vunpack.c.l.b16 %v196
    %v791 = vunpack.c.h.b16 %v196
    %v792 = vunpack.c.l.b16 %v197
    %v793 = vunpack.c.h.b16 %v197
    %v794 = vunpack.c.l.b16 %v198
    %v795 = vunpack.c.h.b16 %v198
    %v796 = vunpack.c.l.b16 %v199
    %v797 = vunpack.c.h.b16 %v199
    %v798 = vunpack.c.l.b16 %v200
    %v799 = vunpack.c.h.b16 %v200
    %v800 = vunpack.c.l.b16 %v201
    %v801 = vunpack.c.h.b16 %v201
    %v802 = vunpack.c.l.b16 %v202
    %v803 = vunpack.c.h.b16 %v202
    %v804 = vunpack.c.l.b16 %v203
    %v805 = vunpack.c.h.b16 %v203
    %v806 = vunpack.c.l.b16 %v204
    %v807 = vunpack.c.h.b16 %v204
    %v808 = vunpack.c.l.b16 %v205
    %v809 = vunpack.c.h.b16 %v205
    %v810 = vunpack.c.l.b16 %v206
    %v811 = vunpack.c.h.b16 %v206
    %v812 = vunpack.c.l.b16 %v207
    %v813 = vunpack.c.h.b16 %v207
    %v814 = vunpack.c.l.b16 %v208
    %v815 = vunpack.c.h.b16 %v208
    %v816 = vunpack.c.l.b16 %v209
    %v817 = vunpack.c.h.b16 %v209
    %v818 = vunpack.c.l.b16 %v210
    %v819 = vunpack.c.h.b16 %v210
    %v820 = vunpack.c.l.b16 %v211
    %v821 = vunpack.c.h.b16 %v211
    %v822 = vunpack.c.l.b16 %v212
    %v823 = vunpack.c.h.b16 %v212
    %v824 = vunpack.c.l.b16 %v213
    %v825 = vunpack.c.h.b16 %v213
    %v826 = vunpack.c.l.b16 %v214
    %v827 = vunpack.c.h.b16 %v214
    %v828 = vunpack.c.l.b16 %v215
    %v829 = vunpack.c.h.b16 %v215
    %v830 = vunpack.c.l.b16 %v216
    %v831 = vunpack.c.h.b16 %v216
    %v832 = vunpack.c.l.b16 %v217
    %v833 = vunpack.c.h.b16 %v217
    %v834 = vunpack.c.l.b16 %v218
    %v835 = vunpack.c.h.b16 %v218
    %v836 = vunpack.c.l.b16 %v219
    %v837 = vunpack.c.h.b16 %v219
    %v838 = vunpack.c.l.b16 %v220
    %v839 = vunpack.c.h.b16 %v220
    %v840 = vunpack.c.l.b16 %v221
    %v841 = vunpack.c.h.b16 %v221
    %v842 = vunpack.c.l.b16 %v222
    %v843 = vunpack.c.h.b16 %v222
    %v844 = vunpack.c.l.b16 %v223
    %v845 = vunpack.c.h.b16 %v223
    %v846 = vunpack.c.l.b16 %v224
    %v847 = vunpack.c.h.b16 %v224
    %v848 = vunpack.c.l.b16 %v225
    %v849 = vunpack.c.h.b16 %v225
    %v850 = vunpack.c.l.b16 %v226
    %v851 = vunpack.c.h.b16 %v226
    %v852 = vunpack.c.l.b16 %v227
    %v853 = vunpack.c.h.b16 %v227
    %v854 = vunpack.c.l.b16 %v228
    %v855 = vunpack.c.h.b16 %v228
    %v856 = vunpack.c.l.b16 %v229
    %v857 = vunpack.c.h.b16 %v229
    %v858 = vunpack.c.l.b16 %v230
    %v859 = vunpack.c.h.b16 %v230
    %v860 = vunpack.c.l.b16 %v231
    %v861 = vunpack.c.h.b16 %v231
    %v862 = vunpack.c.l.b16 %v232
    %v863 = vunpack.c.h.b16 %v232
    %v864 = vunpack.c.l.b16 %v233
    %v865 = vunpack.c.h.b16 %v233
    %v866 = vunpack.c.l.b16 %v234
    %v867 = vunpack.c.h.b16 %v234
    %v868 = vunpack.c.l.b16 %v235
    %v869 = vunpack.c.h.b16 %v235
    %v870 = vpack.c.b16 %v482, %v478
    %v871 = vpack.c.b16 %v483, %v479
    %v872 = vpack.c.b16 %v484, %v480
    %v873 = vpack.c.b16 %v485, %v481
    %v874 = vpack.c.b16 %v490, %v486
    %v875 = vpack.c.b16 %v491, %v487
    %v876 = vpack.c.b16 %v492, %v488
    %v877 = vpack.c.b16 %v493, %v489
    %v878 = vpack.c.b16 %v498, %v494
    %v879 = vpack.c.b16 %v499, %v495
    %v880 = vpack.c.b16 %v500, %v496
    %v881 = vpack.c.b16 %v501, %v497
    %v882 = vpack.c.b16 %v506, %v502
    %v883 = vpack.c.b16 %v507, %v503
    %v884 = vpack.c.b16 %v508, %v504
    %v885 = vpack.c.b16 %v509, %v505
    %v886 = vpack.c.b16 %v514, %v510
    %v887 = vpack.c.b16 %v515, %v511
    %v888 = vpack.c.b16 %v516, %v512
    %v889 = vpack.c.b16 %v517, %v513
    %v890 = vpack.c.b16 %v522, %v518
    %v891 = vpack.c.b16 %v523, %v519
    %v892 = vpack.c.b16 %v524, %v520
    %v893 = vpack.c.b16 %v525, %v521
    %v894 = vpack.c.b16 %v530, %v526
    %v895 = vpack.c.b16 %v531, %v527
    %v896 = vpack.c.b16 %v532, %v528
    %v897 = vpack.c.b16 %v533, %v529
    %v898 = vpack.c.b16 %v538, %v534
    %v899 = vpack.c.b16 %v539, %v535
    %v900 = vpack.c.b16 %v540, %v536
    %v901 = vpack.c.b16 %v541, %v537
    %v902 = vpack.c.b16 %v546, %v542
    %v903 = vpack.c.b16 %v547, %v543
    %v904 = vpack.c.b16 %v548, %v544
    %v905 = vpack.c.b16 %v549, %v545
    %v906 = vpack.c.b16 %v554, %v550
    %v907 = vpack.c.b16 %v555, %v551
    %v908 = vpack.c.b16 %v556, %v552
    %v909 = vpack.c.b16 %v557, %v553
    %v910 = vpack.c.b16 %v562, %v558
    %v911 = vpack.c.b16 %v563, %v559
    %v912 = vpack.c.b16 %v564, %v560
    %v913 = vpack.c.b16 %v565, %v561
    %v914 = vpack.c.b16 %v570, %v566
    %v915 = vpack.c.b16 %v571, %v567
    %v916 = vpack.c.b16 %v572, %v568
    %v917 = vpack.c.b16 %v573, %v569
    %v918 = vpack.c.b16 %v578, %v574
    %v919 = vpack.c.b16 %v579, %v575
    %v920 = vpack.c.b16 %v580, %v576
    %v921 = vpack.c.b16 %v581, %v577
    %v922 = vpack.c.b16 %v586, %v582
    %v923 = vpack.c.b16 %v587, %v583
    %v924 = vpack.c.b16 %v588, %v584
    %v925 = vpack.c.b16 %v589, %v585
    %v926 = vpack.c.b16 %v594, %v590
    %v927 = vpack.c.b16 %v595, %v591
    %v928 = vpack.c.b16 %v596, %v592
    %v929 = vpack.c.b16 %v597, %v593
    %v930 = vpack.c.b16 %v602, %v598
    %v931 = vpack.c.b16 %v603, %v599
    %v932 = vpack.c.b16 %v604, %v600
    %v933 = vpack.c.b16 %v605, %v601
    %v934 = vpack.c.b16 %v610, %v606
    %v935 = vpack.c.b16 %v611, %v607
    %v936 = vpack.c.b16 %v612, %v608
    %v937 = vpack.c.b16 %v613, %v609
    %v938 = vpack.c.b16 %v618, %v614
    %v939 = vpack.c.b16 %v619, %v615
    %v940 = vpack.c.b16 %v620, %v616
    %v941 = vpack.c.b16 %v621, %v617
    %v942 = vpack.c.b16 %v626, %v622
    %v943 = vpack.c.b16 %v627, %v623
    %v944 = vpack.c.b16 %v628, %v624
    %v945 = vpack.c.b16 %v629, %v625
    %v946 = vpack.c.b16 %v634, %v630
    %v947 = vpack.c.b16 %v635, %v631
    %v948 = vpack.c.b16 %v636, %v632
    %v949 = vpack.c.b16 %v637, %v633
    %v950 = vpack.c.b16 %v642, %v638
    %v951 = vpack.c.b16 %v643, %v639
    %v952 = vpack.c.b16 %v644, %v640
    %v953 = vpack.c.b16 %v645, %v641
    %v954 = vpack.c.b16 %v650, %v646
    %v955 = vpack.c.b16 %v651, %v647
    %v956 = vpack.c.b16 %v652, %v648
    %v957 = vpack.c.b16 %v653, %v649
    %v958 = vpack.c.b16 %v658, %v654
    %v959 = vpack.c.b16 %v659, %v655
    %v960 = vpack.c.b16 %v660, %v656
    %v961 = vpack.c.b16 %v661, %v657
    %v962 = vpack.c.b16 %v666, %v662
    %v963 = vpack.c.b16 %v667, %v663
    %v964 = vpack.c.b16 %v668, %v664
    %v965 = vpack.c.b16 %v669, %v665
    %v966 = vpack.c.b16 %v674, %v670
    %v967 = vpack.c.b16 %v675, %v671
    %v968 = vpack.c.b16 %v676, %v672
    %v969 = vpack.c.b16 %v677, %v673
    %v970 = vpack.c.b16 %v682, %v678
    %v971 = vpack.c.b16 %v683, %v679
    %v972 = vpack.c.b16 %v684, %v680
    %v973 = vpack.c.b16 %v685, %v681
    %v974 = vpack.c.b16 %v690, %v686
    %v975 = vpack.c.b16 %v691, %v687
    %v976 = vpack.c.b16 %v692, %v688
    %v977 = vpack.c.b16 %v693, %v689
    %v978 = vpack.c.b16 %v698, %v694
    %v979 = vpack.c.b16 %v699, %v695
    %v980 = vpack.c.b16 %v700, %v696
    %v981 = vpack.c.b16 %v701, %v697
    %v982 = vpack.c.b16 %v706, %v702
    %v983 = vpack.c.b16 %v707, %v703
    %v984 = vpack.c.b16 %v708, %v704
    %v985 = vpack.c.b16 %v709, %v705
    %v986 = vpack.c.b16 %v714, %v710
    %v987 = vpack.c.b16 %v715, %v711
    %v988 = vpack.c.b16 %v716, %v712
    %v989 = vpack.c.b16 %v717, %v713
    %v990 = vpack.c.b16 %v722, %v718
    %v991 = vpack.c.b16 %v723, %v719
    %v992 = vpack.c.b16 %v724, %v720
    %v993 = vpack.c.b16 %v725, %v721
    %v994 = vpack.c.b16 %v730, %v726
    %v995 = vpack.c.b16 %v731, %v727
    %v996 = vpack.c.b16 %v732, %v728
    %v997 = vpack.c.b16 %v733, %v729
    %v998 = vpack.c.b16 %v738, %v734
    %v999 = vpack.c.b16 %v739, %v735
    %v1000 = vpack.c.b16 %v740, %v736
    %v1001 = vpack.c.b16 %v741, %v737
    %v1002 = vpack.c.b16 %v746, %v742
    %v1003 = vpack.c.b16 %v747, %v743
    %v1004 = vpack.c.b16 %v748, %v744
    %v1005 = vpack.c.b16 %v749, %v745
    %v1006 = vpack.c.b16 %v754, %v750
    %v1007 = vpack.c.b16 %v755, %v751
    %v1008 = vpack.c.b16 %v756, %v752
    %v1009 = vpack.c.b16 %v757, %v753
    %v1010 = vpack.c.b16 %v762, %v758
    %v1011 = vpack.c.b16 %v763, %v759
    %v1012 = vpack.c.b16 %v764, %v760
    %v1013 = vpack.c.b16 %v765, %v761
    %v1014 = vpack.c.b16 %v770, %v766
    %v1015 = vpack.c.b16 %v771, %v767
    %v1016 = vpack.c.b16 %v772, %v768
    %v1017 = vpack.c.b16 %v773, %v769
    %v1018 = vpack.c.b16 %v778, %v774
    %v1019 = vpack.c.b16 %v779, %v775
    %v1020 = vpack.c.b16 %v780, %v776
    %v1021 = vpack.c.b16 %v781, %v777
    %v1022 = vpack.c.b16 %v786, %v782
    %v1023 = vpack.c.b16 %v787, %v783
    %v1024 = vpack.c.b16 %v788, %v784
    %v1025 = vpack.c.b16 %v789, %v785
    %v1026 = vpack.c.b16 %v794, %v790
    %v1027 = vpack.c.b16 %v795, %v791
    %v1028 = vpack.c.b16 %v796, %v792
    %v1029 = vpack.c.b16 %v797, %v793
    %v1030 = vpack.c.b16 %v802, %v798
    %v1031 = vpack.c.b16 %v803, %v799
    %v1032 = vpack.c.b16 %v804, %v800
    %v1033 = vpack.c.b16 %v805, %v801
    %v1034 = vpack.c.b16 %v810, %v806
    %v1035 = vpack.c.b16 %v811, %v807
    %v1036 = vpack.c.b16 %v812, %v808
    %v1037 = vpack.c.b16 %v813, %v809
    %v1038 = vpack.c.b16 %v818, %v814
    %v1039 = vpack.c.b16 %v819, %v815
    %v1040 = vpack.c.b16 %v820, %v816
    %v1041 = vpack.c.b16 %v821, %v817
    %v1042 = vpack.c.b16 %v826, %v822
    %v1043 = vpack.c.b16 %v827, %v823
    %v1044 = vpack.c.b16 %v828, %v824
    %v1045 = vpack.c.b16 %v829, %v825
    %v1046 = vpack.c.b16 %v834, %v830
    %v1047 = vpack.c.b16 %v835, %v831
    %v1048 = vpack.c.b16 %v836, %v832
    %v1049 = vpack.c.b16 %v837, %v833
    %v1050 = vpack.c.b16 %v842, %v838
    %v1051 = vpack.c.b16 %v843, %v839
    %v1052 = vpack.c.b16 %v844, %v840
    %v1053 = vpack.c.b16 %v845, %v841
    %v1054 = vpack.c.b16 %v850, %v846
    %v1055 = vpack.c.b16 %v851, %v847
    %v1056 = vpack.c.b16 %v852, %v848
    %v1057 = vpack.c.b16 %v853, %v849
    %v1058 = vpack.c.b16 %v858, %v854
    %v1059 = vpack.c.b16 %v859, %v855
    %v1060 = vpack.c.b16 %v860, %v856
    %v1061 = vpack.c.b16 %v861, %v857
    %v1062 = vpack.c.b16 %v866, %v862
    %v1063 = vpack.c.b16 %v867, %v863
    %v1064 = vpack.c.b16 %v868, %v864
    %v1065 = vpack.c.b16 %v869, %v865
    %vm1262 = vcmask 130048
    %v1264 = vsel %vm1262, %v275, 0
    %1266 = vmatprep.subr.bf16.mxu0 %v871
    %1267 = vmatpush1.bf16.msra.mxu0 %v870
    %1268 = vmatprep.subr.bf16.mxu0 %v875
    %1269 = vmatpush1.bf16.msra.mxu0 %v874
    %1270 = vmatprep.subr.bf16.mxu0 %v879
    %1271 = vmatpush1.bf16.msra.mxu0 %v878
    %1272 = vmatprep.subr.bf16.mxu0 %v883
    %1273 = vmatpush1.bf16.msra.mxu0 %v882
    %1274 = vmatprep.subr.bf16.mxu0 %v887
    %1275 = vmatpush1.bf16.msra.mxu0 %v886
    %1276 = vmatprep.subr.bf16.mxu0 %v891
    %1277 = vmatpush1.bf16.msra.mxu0 %v890
    %1278 = vmatprep.subr.bf16.mxu0 %v895
    %1279 = vmatpush1.bf16.msra.mxu0 %v894
    %1280 = vmatprep.subr.bf16.mxu0 %v899
    %1281 = vmatpush1.bf16.msra.mxu0 %v898
    %1282 = vmatprep.subr.bf16.mxu0 %v903
    %1283 = vmatpush1.bf16.msra.mxu0 %v902
    %1284 = vmatprep.subr.bf16.mxu0 %v907
    %1285 = vmatpush1.bf16.msra.mxu0 %v906
    %1286 = vmatprep.subr.bf16.mxu0 %v911
    %1287 = vmatpush1.bf16.msra.mxu0 %v910
    %1288 = vmatprep.subr.bf16.mxu0 %v915
    %1289 = vmatpush1.bf16.msra.mxu0 %v914
    %1290 = vmatprep.subr.bf16.mxu0 %v919
    %1291 = vmatpush1.bf16.msra.mxu0 %v918
    %1292 = vmatprep.subr.bf16.mxu0 %v923
    %1293 = vmatpush1.bf16.msra.mxu0 %v922
    %1294 = vmatprep.subr.bf16.mxu0 %v927
    %1295 = vmatpush1.bf16.msra.mxu0 %v926
    %1296 = vmatprep.subr.bf16.mxu0 %v931
    %1297 = vmatpush1.bf16.msra.mxu0 %v930
    %1298 = vmatprep.mubr.bf16.mxu0 %v270
    %1299 = vmatmul.mubr.bf16.gmra.mrb[0].mxu0 %v269
    %v1300 = vpop.f32.mrb[0].mxu0
    %v1301 = vadd.f32 %v241, %v1300
    %v1302 = vpop.f32.mrb[0].mxu0
    %v1303 = vadd.f32 %v245, %v1302
    %v1304 = vpop.f32.mrb[0].mxu0
    %v1305 = vpop.f32.mrb[0].mxu0
    %1306 = vdwg.mxu0
    %1307 = vmatprep.subr.bf16.mxu0 %v935
    %1308 = vmatpush1.bf16.msra.mxu0 %v934
    %1309 = vmatprep.subr.bf16.mxu0 %v939
    %1310 = vmatpush1.bf16.msra.mxu0 %v938
    %1311 = vmatprep.subr.bf16.mxu0 %v943
    %1312 = vmatpush1.bf16.msra.mxu0 %v942
    %1313 = vmatprep.subr.bf16.mxu0 %v947
    %1314 = vmatpush1.bf16.msra.mxu0 %v946
    %1315 = vmatprep.subr.bf16.mxu0 %v951
    %1316 = vmatpush1.bf16.msra.mxu0 %v950
    %1317 = vmatprep.subr.bf16.mxu0 %v955
    %1318 = vmatpush1.bf16.msra.mxu0 %v954
    %1319 = vmatprep.subr.bf16.mxu0 %v959
    %1320 = vmatpush1.bf16.msra.mxu0 %v958
    %1321 = vmatprep.subr.bf16.mxu0 %v963
    %1322 = vmatpush1.bf16.msra.mxu0 %v962
    %1323 = vmatprep.subr.bf16.mxu0 %v967
    %1324 = vmatpush1.bf16.msra.mxu0 %v966
    %1325 = vmatprep.subr.bf16.mxu0 %v971
    %1326 = vmatpush1.bf16.msra.mxu0 %v970
    %1327 = vmatprep.subr.bf16.mxu0 %v975
    %1328 = vmatpush1.bf16.msra.mxu0 %v974
    %1329 = vmatprep.subr.bf16.mxu0 %v979
    %1330 = vmatpush1.bf16.msra.mxu0 %v978
    %1331 = vmatprep.subr.bf16.mxu0 %v983
    %1332 = vmatpush1.bf16.msra.mxu0 %v982
    %1333 = vmatprep.subr.bf16.mxu0 %v987
    %1334 = vmatpush1.bf16.msra.mxu0 %v986
    %1335 = vmatprep.subr.bf16.mxu0 %v991
    %1336 = vmatpush1.bf16.msra.mxu0 %v990
    %1337 = vmatprep.subr.bf16.mxu0 %v995
    %1338 = vmatpush1.bf16.msra.mxu0 %v994
    %1339 = vmatprep.mubr.bf16.mxu0 %v272
    %1340 = vmatmul.mubr.bf16.gmra.mrb[0].mxu0 %v271
    %v1341 = vpop.f32.mrb[0].mxu0
    %v1342 = vadd.f32 %v1301, %v1341
    %v1343 = vpop.f32.mrb[0].mxu0
    %v1344 = vadd.f32 %v1303, %v1343
    %v1345 = vpop.f32.mrb[0].mxu0
    %v1346 = vpop.f32.mrb[0].mxu0
    %1347 = vdwg.mxu0
    %1348 = vmatprep.subr.bf16.mxu0 %v999
    %1349 = vmatpush1.bf16.msra.mxu0 %v998
    %1350 = vmatprep.subr.bf16.mxu0 %v1003
    %1351 = vmatpush1.bf16.msra.mxu0 %v1002
    %1352 = vmatprep.subr.bf16.mxu0 %v1007
    %1353 = vmatpush1.bf16.msra.mxu0 %v1006
    %1354 = vmatprep.subr.bf16.mxu0 %v1011
    %1355 = vmatpush1.bf16.msra.mxu0 %v1010
    %1356 = vmatprep.subr.bf16.mxu0 %v1015
    %1357 = vmatpush1.bf16.msra.mxu0 %v1014
    %1358 = vmatprep.subr.bf16.mxu0 %v1019
    %1359 = vmatpush1.bf16.msra.mxu0 %v1018
    %1360 = vmatprep.subr.bf16.mxu0 %v1023
    %1361 = vmatpush1.bf16.msra.mxu0 %v1022
    %1362 = vmatprep.subr.bf16.mxu0 %v1027
    %1363 = vmatpush1.bf16.msra.mxu0 %v1026
    %1364 = vmatprep.subr.bf16.mxu0 %v1031
    %1365 = vmatpush1.bf16.msra.mxu0 %v1030
    %1366 = vmatprep.subr.bf16.mxu0 %v1035
    %1367 = vmatpush1.bf16.msra.mxu0 %v1034
    %1368 = vmatprep.subr.bf16.mxu0 %v1039
    %1369 = vmatpush1.bf16.msra.mxu0 %v1038
    %1370 = vmatprep.subr.bf16.mxu0 %v1043
    %1371 = vmatpush1.bf16.msra.mxu0 %v1042
    %1372 = vmatprep.subr.bf16.mxu0 %v1047
    %1373 = vmatpush1.bf16.msra.mxu0 %v1046
    %1374 = vmatprep.subr.bf16.mxu0 %v1051
    %1375 = vmatpush1.bf16.msra.mxu0 %v1050
    %1376 = vmatprep.subr.bf16.mxu0 %v1055
    %1377 = vmatpush1.bf16.msra.mxu0 %v1054
    %1378 = vmatprep.subr.bf16.mxu0 %v1059
    %1379 = vmatpush1.bf16.msra.mxu0 %v1058
    %1380 = vmatprep.mubr.bf16.mxu0 %v274
    %1381 = vmatmul.mubr.bf16.gmra.mrb[0].mxu0 %v273
    %v1382 = vpop.f32.mrb[0].mxu0
    %v1383 = vadd.f32 %v1342, %v1382
    %v1384 = vpop.f32.mrb[0].mxu0
    %v1385 = vadd.f32 %v1344, %v1384
    %v1386 = vpop.f32.mrb[0].mxu0
    %v1387 = vpop.f32.mrb[0].mxu0
    %1388 = vdwg.mxu0
    %1389 = vmatprep.subr.bf16.mxu0 %v1063
    %1390 = vmatpush1.bf16.msra.mxu0 %v1062
    %1391 = vmatprep.subr.bf16.mxu0 0
    %1392 = vmatpush1.bf16.msra.mxu0 0
    %1393 = vmatprep.subr.bf16.mxu0 0
    %1394 = vmatpush1.bf16.msra.mxu0 0
    %1395 = vmatprep.subr.bf16.mxu0 0
    %1396 = vmatpush1.bf16.msra.mxu0 0
    %1397 = vmatprep.subr.bf16.mxu0 0
    %1398 = vmatpush1.bf16.msra.mxu0 0
    %1399 = vmatprep.subr.bf16.mxu0 0
    %1400 = vmatpush1.bf16.msra.mxu0 0
    %1401 = vmatprep.subr.bf16.mxu0 0
    %1402 = vmatpush1.bf16.msra.mxu0 0
    %1403 = vmatprep.subr.bf16.mxu0 0
    %1404 = vmatpush1.bf16.msra.mxu0 0
    %1405 = vmatprep.subr.bf16.mxu0 0
    %1406 = vmatpush1.bf16.msra.mxu0 0
    %1407 = vmatprep.subr.bf16.mxu0 0
    %1408 = vmatpush1.bf16.msra.mxu0 0
    %1409 = vmatprep.subr.bf16.mxu0 0
    %1410 = vmatpush1.bf16.msra.mxu0 0
    %1411 = vmatprep.subr.bf16.mxu0 0
    %1412 = vmatpush1.bf16.msra.mxu0 0
    %1413 = vmatprep.subr.bf16.mxu0 0
    %1414 = vmatpush1.bf16.msra.mxu0 0
    %1415 = vmatprep.subr.bf16.mxu0 0
    %1416 = vmatpush1.bf16.msra.mxu0 0
    %1417 = vmatprep.subr.bf16.mxu0 0
    %1418 = vmatpush1.bf16.msra.mxu0 0
    %1419 = vmatprep.subr.bf16.mxu0 0
    %1420 = vmatpush1.bf16.msra.mxu0 0
    %1421 = vmatprep.mubr.bf16.mxu0 0
    %1422 = vmatmul.mubr.bf16.gmra.mrb[0].mxu0 %v1264
    %v1423 = vpop.f32.mrb[0].mxu0
    %v1424 = vadd.f32 %v1383, %v1423
    %v1425 = vpop.f32.mrb[0].mxu0
    %v1426 = vadd.f32 %v1385, %v1425
    %v1427 = vpop.f32.mrb[0].mxu0
    %v1428 = vpop.f32.mrb[0].mxu0
    %1429 = vdwg.mxu0
    %1430 = vmatprep.subr.bf16.mxu0 %v873
    %1431 = vmatpush1.bf16.msra.mxu0 %v872
    %1432 = vmatprep.subr.bf16.mxu0 %v877
    %1433 = vmatpush1.bf16.msra.mxu0 %v876
    %1434 = vmatprep.subr.bf16.mxu0 %v881
    %1435 = vmatpush1.bf16.msra.mxu0 %v880
    %1436 = vmatprep.subr.bf16.mxu0 %v885
    %1437 = vmatpush1.bf16.msra.mxu0 %v884
    %1438 = vmatprep.subr.bf16.mxu0 %v889
    %1439 = vmatpush1.bf16.msra.mxu0 %v888
    %1440 = vmatprep.subr.bf16.mxu0 %v893
    %1441 = vmatpush1.bf16.msra.mxu0 %v892
    %1442 = vmatprep.subr.bf16.mxu0 %v897
    %1443 = vmatpush1.bf16.msra.mxu0 %v896
    %1444 = vmatprep.subr.bf16.mxu0 %v901
    %1445 = vmatpush1.bf16.msra.mxu0 %v900
    %1446 = vmatprep.subr.bf16.mxu0 %v905
    %1447 = vmatpush1.bf16.msra.mxu0 %v904
    %1448 = vmatprep.subr.bf16.mxu0 %v909
    %1449 = vmatpush1.bf16.msra.mxu0 %v908
    %1450 = vmatprep.subr.bf16.mxu0 %v913
    %1451 = vmatpush1.bf16.msra.mxu0 %v912
    %1452 = vmatprep.subr.bf16.mxu0 %v917
    %1453 = vmatpush1.bf16.msra.mxu0 %v916
    %1454 = vmatprep.subr.bf16.mxu0 %v921
    %1455 = vmatpush1.bf16.msra.mxu0 %v920
    %1456 = vmatprep.subr.bf16.mxu0 %v925
    %1457 = vmatpush1.bf16.msra.mxu0 %v924
    %1458 = vmatprep.subr.bf16.mxu0 %v929
    %1459 = vmatpush1.bf16.msra.mxu0 %v928
    %1460 = vmatprep.subr.bf16.mxu0 %v933
    %1461 = vmatpush1.bf16.msra.mxu0 %v932
    %1462 = vmatprep.mubr.bf16.mxu0 %v270
    %1463 = vmatmul.mubr.bf16.gmra.mrb[0].mxu0 %v269
    %v1464 = vpop.f32.mrb[0].mxu0
    %v1465 = vadd.f32 %v249, %v1464
    %v1466 = vpop.f32.mrb[0].mxu0
    %v1467 = vadd.f32 %v253, %v1466
    %v1468 = vpop.f32.mrb[0].mxu0
    %v1469 = vpop.f32.mrb[0].mxu0
    %1470 = vdwg.mxu0
    %1471 = vmatprep.subr.bf16.mxu0 %v937
    %1472 = vmatpush1.bf16.msra.mxu0 %v936
    %1473 = vmatprep.subr.bf16.mxu0 %v941
    %1474 = vmatpush1.bf16.msra.mxu0 %v940
    %1475 = vmatprep.subr.bf16.mxu0 %v945
    %1476 = vmatpush1.bf16.msra.mxu0 %v944
    %1477 = vmatprep.subr.bf16.mxu0 %v949
    %1478 = vmatpush1.bf16.msra.mxu0 %v948
    %1479 = vmatprep.subr.bf16.mxu0 %v953
    %1480 = vmatpush1.bf16.msra.mxu0 %v952
    %1481 = vmatprep.subr.bf16.mxu0 %v957
    %1482 = vmatpush1.bf16.msra.mxu0 %v956
    %1483 = vmatprep.subr.bf16.mxu0 %v961
    %1484 = vmatpush1.bf16.msra.mxu0 %v960
    %1485 = vmatprep.subr.bf16.mxu0 %v965
    %1486 = vmatpush1.bf16.msra.mxu0 %v964
    %1487 = vmatprep.subr.bf16.mxu0 %v969
    %1488 = vmatpush1.bf16.msra.mxu0 %v968
    %1489 = vmatprep.subr.bf16.mxu0 %v973
    %1490 = vmatpush1.bf16.msra.mxu0 %v972
    %1491 = vmatprep.subr.bf16.mxu0 %v977
    %1492 = vmatpush1.bf16.msra.mxu0 %v976
    %1493 = vmatprep.subr.bf16.mxu0 %v981
    %1494 = vmatpush1.bf16.msra.mxu0 %v980
    %1495 = vmatprep.subr.bf16.mxu0 %v985
    %1496 = vmatpush1.bf16.msra.mxu0 %v984
    %1497 = vmatprep.subr.bf16.mxu0 %v989
    %1498 = vmatpush1.bf16.msra.mxu0 %v988
    %1499 = vmatprep.subr.bf16.mxu0 %v993
    %1500 = vmatpush1.bf16.msra.mxu0 %v992
    %1501 = vmatprep.subr.bf16.mxu0 %v997
    %1502 = vmatpush1.bf16.msra.mxu0 %v996
    %1503 = vmatprep.mubr.bf16.mxu0 %v272
    %1504 = vmatmul.mubr.bf16.gmra.mrb[0].mxu0 %v271
    %v1505 = vpop.f32.mrb[0].mxu0
    %v1506 = vadd.f32 %v1465, %v1505
    %v1507 = vpop.f32.mrb[0].mxu0
    %v1508 = vadd.f32 %v1467, %v1507
    %v1509 = vpop.f32.mrb[0].mxu0
    %v1510 = vpop.f32.mrb[0].mxu0
    %1511 = vdwg.mxu0
    %1512 = vmatprep.subr.bf16.mxu0 %v1001
    %1513 = vmatpush1.bf16.msra.mxu0 %v1000
    %1514 = vmatprep.subr.bf16.mxu0 %v1005
    %1515 = vmatpush1.bf16.msra.mxu0 %v1004
    %1516 = vmatprep.subr.bf16.mxu0 %v1009
    %1517 = vmatpush1.bf16.msra.mxu0 %v1008
    %1518 = vmatprep.subr.bf16.mxu0 %v1013
    %1519 = vmatpush1.bf16.msra.mxu0 %v1012
    %1520 = vmatprep.subr.bf16.mxu0 %v1017
    %1521 = vmatpush1.bf16.msra.mxu0 %v1016
    %1522 = vmatprep.subr.bf16.mxu0 %v1021
    %1523 = vmatpush1.bf16.msra.mxu0 %v1020
    %1524 = vmatprep.subr.bf16.mxu0 %v1025
    %1525 = vmatpush1.bf16.msra.mxu0 %v1024
    %1526 = vmatprep.subr.bf16.mxu0 %v1029
    %1527 = vmatpush1.bf16.msra.mxu0 %v1028
    %1528 = vmatprep.subr.bf16.mxu0 %v1033
    %1529 = vmatpush1.bf16.msra.mxu0 %v1032
    %1530 = vmatprep.subr.bf16.mxu0 %v1037
    %1531 = vmatpush1.bf16.msra.mxu0 %v1036
    %1532 = vmatprep.subr.bf16.mxu0 %v1041
    %1533 = vmatpush1.bf16.msra.mxu0 %v1040
    %1534 = vmatprep.subr.bf16.mxu0 %v1045
    %1535 = vmatpush1.bf16.msra.mxu0 %v1044
    %1536 = vmatprep.subr.bf16.mxu0 %v1049
    %1537 = vmatpush1.bf16.msra.mxu0 %v1048
    %1538 = vmatprep.subr.bf16.mxu0 %v1053
    %1539 = vmatpush1.bf16.msra.mxu0 %v1052
    %1540 = vmatprep.subr.bf16.mxu0 %v1057
    %1541 = vmatpush1.bf16.msra.mxu0 %v1056
    %1542 = vmatprep.subr.bf16.mxu0 %v1061
    %1543 = vmatpush1.bf16.msra.mxu0 %v1060
    %1544 = vmatprep.mubr.bf16.mxu0 %v274
    %1545 = vmatmul.mubr.bf16.gmra.mrb[0].mxu0 %v273
    %v1546 = vpop.f32.mrb[0].mxu0
    %v1547 = vadd.f32 %v1506, %v1546
    %v1548 = vpop.f32.mrb[0].mxu0
    %v1549 = vadd.f32 %v1508, %v1548
    %v1550 = vpop.f32.mrb[0].mxu0
    %v1551 = vpop.f32.mrb[0].mxu0
    %1552 = vdwg.mxu0
    %1553 = vmatprep.subr.bf16.mxu0 %v1065
    %1554 = vmatpush1.bf16.msra.mxu0 %v1064
    %1555 = vmatprep.subr.bf16.mxu0 0
    %1556 = vmatpush1.bf16.msra.mxu0 0
    %1557 = vmatprep.subr.bf16.mxu0 0
    %1558 = vmatpush1.bf16.msra.mxu0 0
    %1559 = vmatprep.subr.bf16.mxu0 0
    %1560 = vmatpush1.bf16.msra.mxu0 0
    %1561 = vmatprep.subr.bf16.mxu0 0
    %1562 = vmatpush1.bf16.msra.mxu0 0
    %1563 = vmatprep.subr.bf16.mxu0 0
    %1564 = vmatpush1.bf16.msra.mxu0 0
    %1565 = vmatprep.subr.bf16.mxu0 0
    %1566 = vmatpush1.bf16.msra.mxu0 0
    %1567 = vmatprep.subr.bf16.mxu0 0
    %1568 = vmatpush1.bf16.msra.mxu0 0
    %1569 = vmatprep.subr.bf16.mxu0 0
    %1570 = vmatpush1.bf16.msra.mxu0 0
    %1571 = vmatprep.subr.bf16.mxu0 0
    %1572 = vmatpush1.bf16.msra.mxu0 0
    %1573 = vmatprep.subr.bf16.mxu0 0
    %1574 = vmatpush1.bf16.msra.mxu0 0
    %1575 = vmatprep.subr.bf16.mxu0 0
    %1576 = vmatpush1.bf16.msra.mxu0 0
    %1577 = vmatprep.subr.bf16.mxu0 0
    %1578 = vmatpush1.bf16.msra.mxu0 0
    %1579 = vmatprep.subr.bf16.mxu0 0
    %1580 = vmatpush1.bf16.msra.mxu0 0
    %1581 = vmatprep.subr.bf16.mxu0 0
    %1582 = vmatpush1.bf16.msra.mxu0 0
    %1583 = vmatprep.subr.bf16.mxu0 0
    %1584 = vmatpush1.bf16.msra.mxu0 0
    %1585 = vmatprep.mubr.bf16.mxu0 0
    %1586 = vmatmul.mubr.bf16.gmra.mrb[0].mxu0 %v1264
    %v1587 = vpop.f32.mrb[0].mxu0
    %v1588 = vadd.f32 %v1547, %v1587
    %v1589 = vpop.f32.mrb[0].mxu0
    %v1590 = vadd.f32 %v1549, %v1589
    %v1591 = vpop.f32.mrb[0].mxu0
    %v1592 = vpop.f32.mrb[0].mxu0
    %1593 = vdwg.mxu0
    %v1594 = vmax.f32 %v1424, 0.0
    %v1595 = vmax.f32 %v1426, 0.0
    %v1596 = vmax.f32 %v1588, 0.0
    %v1597 = vmax.f32 %v1590, 0.0
    %v1598 = vpack.c.bf16 %v1594, %v1594
    %v1599 = vpack.c.bf16 %v1595, %v1595
    %v1600 = vpack.c.bf16 %v1596, %v1596
    %v1601 = vpack.c.bf16 %v1597, %v1597
    %v1602 = vld [vmem:[%s3] sm:$0xf]
    %v1603 = vld [vmem:[%s3 + $0x4] sm:$0xf]
    %v1604 = vld [vmem:[%s3 + $0x8] sm:$0xf]
    %v1605 = vld [vmem:[%s3 + $0xc] sm:$0xf]
    %v1606 = vld [vmem:[%s3 + $0x10] sm:$0xf]
    %v1607 = vld [vmem:[%s3 + $0x14] sm:$0xf]
    %v1608 = vld [vmem:[%s3 + $0x18] sm:$0xf]
    %v1609 = vld [vmem:[%s3 + $0x1c] sm:$0xf]
    %v1610 = vld [vmem:[%s3 + $0x20] sm:$0xf]
    %v1611 = vld [vmem:[%s3 + $0x24] sm:$0xf]
    %v1612 = vld [vmem:[%s3 + $0x28] sm:$0xf]
    %v1613 = vld [vmem:[%s3 + $0x2c] sm:$0xf]
    %v1614 = vld [vmem:[%s3 + $0x30] sm:$0xf]
    %v1615 = vld [vmem:[%s3 + $0x34] sm:$0xf]
    %v1616 = vld [vmem:[%s3 + $0x38] sm:$0xf]
    %v1617 = vld [vmem:[%s3 + $0x3c] sm:$0xf]
    %v1618 = vld [vmem:[%s3 + $0x40] sm:$0xf]
    %v1619 = vld [vmem:[%s3 + $0x44] sm:$0xf]
    %v1620 = vld [vmem:[%s3 + $0x48] sm:$0xf]
    %v1621 = vld [vmem:[%s3 + $0x4c] sm:$0xf]
    %v1622 = vld [vmem:[%s3 + $0x50] sm:$0xf]
    %v1623 = vld [vmem:[%s3 + $0x54] sm:$0xf]
    %v1624 = vld [vmem:[%s3 + $0x58] sm:$0xf]
    %v1625 = vld [vmem:[%s3 + $0x5c] sm:$0xf]
    %v1626 = vld [vmem:[%s3 + $0x60] sm:$0xf]
    %v1627 = vld [vmem:[%s3 + $0x64] sm:$0xf]
    %v1628 = vld [vmem:[%s3 + $0x68] sm:$0xf]
    %v1629 = vld [vmem:[%s3 + $0x6c] sm:$0xf]
    %v1630 = vld [vmem:[%s3 + $0x70] sm:$0xf]
    %v1631 = vld [vmem:[%s3 + $0x74] sm:$0xf]
    %v1632 = vld [vmem:[%s3 + $0x78] sm:$0xf]
    %v1633 = vld [vmem:[%s3 + $0x7c] sm:$0xf]
    %v1634 = vld [vmem:[%s3 + $0x80] sm:$0xf]
    %v1635 = vld [vmem:[%s3 + $0x84] sm:$0xf]
    %v1636 = vld [vmem:[%s3 + $0x88] sm:$0xf]
    %v1637 = vld [vmem:[%s3 + $0x8c] sm:$0xf]
    %v1638 = vld [vmem:[%s3 + $0x90] sm:$0xf]
    %v1639 = vld [vmem:[%s3 + $0x94] sm:$0xf]
    %v1640 = vld [vmem:[%s3 + $0x98] sm:$0xf]
    %v1641 = vld [vmem:[%s3 + $0x9c] sm:$0xf]
    %v1642 = vld [vmem:[%s3 + $0xa0] sm:$0xf]
    %v1643 = vld [vmem:[%s3 + $0xa4] sm:$0xf]
    %v1644 = vld [vmem:[%s3 + $0xa8] sm:$0xf]
    %v1645 = vld [vmem:[%s3 + $0xac] sm:$0xf]
    %v1646 = vld [vmem:[%s3 + $0xb0] sm:$0xf]
    %v1647 = vld [vmem:[%s3 + $0xb4] sm:$0xf]
    %v1648 = vld [vmem:[%s3 + $0xb8] sm:$0xf]
    %v1649 = vld [vmem:[%s3 + $0xbc] sm:$0xf]
    %v1650 = vld [vmem:[%s3 + $0xc0] sm:$0xf]
    %v1651 = vld [vmem:[%s3 + $0xc4] sm:$0xf]
    %v1652 = vld [vmem:[%s3 + $0xc8] sm:$0xf]
    %v1653 = vld [vmem:[%s3 + $0xcc] sm:$0xf]
    %v1654 = vld [vmem:[%s3 + $0xd0] sm:$0xf]
    %v1655 = vld [vmem:[%s3 + $0xd4] sm:$0xf]
    %v1656 = vld [vmem:[%s3 + $0xd8] sm:$0xf]
    %v1657 = vld [vmem:[%s3 + $0xdc] sm:$0xf]
    %v1658 = vld [vmem:[%s3 + $0xe0] sm:$0xf]
    %v1659 = vld [vmem:[%s3 + $0xe4] sm:$0xf]
    %v1660 = vld [vmem:[%s3 + $0xe8] sm:$0xf]
    %v1661 = vld [vmem:[%s3 + $0xec] sm:$0xf]
    %v1662 = vld [vmem:[%s3 + $0xf0] sm:$0xf]
    %v1663 = vld [vmem:[%s3 + $0xf4] sm:$0xf]
    %v1664 = vld [vmem:[%s3 + $0xf8] sm:$0xf]
    %v1665 = vld [vmem:[%s3 + $0xfc] sm:$0xf]
    %v1666 = vld [vmem:[%s4] sm:$0x1]
    %v1668 = vlaneseq
    %v1669 = vshrl.u32 %v1668, 7
    %v1670 = vsub.s32 0, %v1669
    %v1671 = vrot.slane %v1666, %v1670
    %v1737 = vunpack.c.l.b16 %v1602
    %v1738 = vunpack.c.l.b16 %v1603
    %v1739 = vunpack.c.l.b16 %v1604
    %v1740 = vunpack.c.l.b16 %v1605
    %v1741 = vunpack.c.l.b16 %v1606
    %v1742 = vunpack.c.l.b16 %v1607
    %v1743 = vunpack.c.l.b16 %v1608
    %v1744 = vunpack.c.l.b16 %v1609
    %v1745 = vunpack.c.l.b16 %v1610
    %v1746 = vunpack.c.l.b16 %v1611
    %v1747 = vunpack.c.l.b16 %v1612
    %v1748 = vunpack.c.l.b16 %v1613
    %v1749 = vunpack.c.l.b16 %v1614
    %v1750 = vunpack.c.l.b16 %v1615
    %v1751 = vunpack.c.l.b16 %v1616
    %v1752 = vunpack.c.l.b16 %v1617
    %v1753 = vunpack.c.l.b16 %v1618
    %v1754 = vunpack.c.l.b16 %v1619
    %v1755 = vunpack.c.l.b16 %v1620
    %v1756 = vunpack.c.l.b16 %v1621
    %v1757 = vunpack.c.l.b16 %v1622
    %v1758 = vunpack.c.l.b16 %v1623
    %v1759 = vunpack.c.l.b16 %v1624
    %v1760 = vunpack.c.l.b16 %v1625
    %v1761 = vunpack.c.l.b16 %v1626
    %v1762 = vunpack.c.l.b16 %v1627
    %v1763 = vunpack.c.l.b16 %v1628
    %v1764 = vunpack.c.l.b16 %v1629
    %v1765 = vunpack.c.l.b16 %v1630
    %v1766 = vunpack.c.l.b16 %v1631
    %v1767 = vunpack.c.l.b16 %v1632
    %v1768 = vunpack.c.l.b16 %v1633
    %v1769 = vunpack.c.l.b16 %v1634
    %v1770 = vunpack.c.l.b16 %v1635
    %v1771 = vunpack.c.l.b16 %v1636
    %v1772 = vunpack.c.l.b16 %v1637
    %v1773 = vunpack.c.l.b16 %v1638
    %v1774 = vunpack.c.l.b16 %v1639
    %v1775 = vunpack.c.l.b16 %v1640
    %v1776 = vunpack.c.l.b16 %v1641
    %v1777 = vunpack.c.l.b16 %v1642
    %v1778 = vunpack.c.l.b16 %v1643
    %v1779 = vunpack.c.l.b16 %v1644
    %v1780 = vunpack.c.l.b16 %v1645
    %v1781 = vunpack.c.l.b16 %v1646
    %v1782 = vunpack.c.l.b16 %v1647
    %v1783 = vunpack.c.l.b16 %v1648
    %v1784 = vunpack.c.l.b16 %v1649
    %v1785 = vunpack.c.l.b16 %v1650
    %v1786 = vunpack.c.l.b16 %v1651
    %v1787 = vunpack.c.l.b16 %v1652
    %v1788 = vunpack.c.l.b16 %v1653
    %v1789 = vunpack.c.l.b16 %v1654
    %v1790 = vunpack.c.l.b16 %v1655
    %v1791 = vunpack.c.l.b16 %v1656
    %v1792 = vunpack.c.l.b16 %v1657
    %v1793 = vunpack.c.l.b16 %v1658
    %v1794 = vunpack.c.l.b16 %v1659
    %v1795 = vunpack.c.l.b16 %v1660
    %v1796 = vunpack.c.l.b16 %v1661
    %v1797 = vunpack.c.l.b16 %v1662
    %v1798 = vunpack.c.l.b16 %v1663
    %v1799 = vunpack.c.l.b16 %v1664
    %v1800 = vunpack.c.l.b16 %v1665
    %v1801 = vpack.c.b16 %v1738, %v1737
    %v1802 = vpack.c.b16 %v1740, %v1739
    %v1803 = vpack.c.b16 %v1742, %v1741
    %v1804 = vpack.c.b16 %v1744, %v1743
    %v1805 = vpack.c.b16 %v1746, %v1745
    %v1806 = vpack.c.b16 %v1748, %v1747
    %v1807 = vpack.c.b16 %v1750, %v1749
    %v1808 = vpack.c.b16 %v1752, %v1751
    %v1809 = vpack.c.b16 %v1754, %v1753
    %v1810 = vpack.c.b16 %v1756, %v1755
    %v1811 = vpack.c.b16 %v1758, %v1757
    %v1812 = vpack.c.b16 %v1760, %v1759
    %v1813 = vpack.c.b16 %v1762, %v1761
    %v1814 = vpack.c.b16 %v1764, %v1763
    %v1815 = vpack.c.b16 %v1766, %v1765
    %v1816 = vpack.c.b16 %v1768, %v1767
    %v1817 = vpack.c.b16 %v1770, %v1769
    %v1818 = vpack.c.b16 %v1772, %v1771
    %v1819 = vpack.c.b16 %v1774, %v1773
    %v1820 = vpack.c.b16 %v1776, %v1775
    %v1821 = vpack.c.b16 %v1778, %v1777
    %v1822 = vpack.c.b16 %v1780, %v1779
    %v1823 = vpack.c.b16 %v1782, %v1781
    %v1824 = vpack.c.b16 %v1784, %v1783
    %v1825 = vpack.c.b16 %v1786, %v1785
    %v1826 = vpack.c.b16 %v1788, %v1787
    %v1827 = vpack.c.b16 %v1790, %v1789
    %v1828 = vpack.c.b16 %v1792, %v1791
    %v1829 = vpack.c.b16 %v1794, %v1793
    %v1830 = vpack.c.b16 %v1796, %v1795
    %v1831 = vpack.c.b16 %v1798, %v1797
    %v1832 = vpack.c.b16 %v1800, %v1799
    %1865 = vmatprep.subr.bf16.mxu0 0
    %1866 = vmatpush1.bf16.msra.mxu0 %v1801
    %1867 = vmatprep.subr.bf16.mxu0 0
    %1868 = vmatpush1.bf16.msra.mxu0 %v1802
    %1869 = vmatprep.subr.bf16.mxu0 0
    %1870 = vmatpush1.bf16.msra.mxu0 %v1803
    %1871 = vmatprep.subr.bf16.mxu0 0
    %1872 = vmatpush1.bf16.msra.mxu0 %v1804
    %1873 = vmatprep.subr.bf16.mxu0 0
    %1874 = vmatpush1.bf16.msra.mxu0 %v1805
    %1875 = vmatprep.subr.bf16.mxu0 0
    %1876 = vmatpush1.bf16.msra.mxu0 %v1806
    %1877 = vmatprep.subr.bf16.mxu0 0
    %1878 = vmatpush1.bf16.msra.mxu0 %v1807
    %1879 = vmatprep.subr.bf16.mxu0 0
    %1880 = vmatpush1.bf16.msra.mxu0 %v1808
    %1881 = vmatprep.subr.bf16.mxu0 0
    %1882 = vmatpush1.bf16.msra.mxu0 %v1809
    %1883 = vmatprep.subr.bf16.mxu0 0
    %1884 = vmatpush1.bf16.msra.mxu0 %v1810
    %1885 = vmatprep.subr.bf16.mxu0 0
    %1886 = vmatpush1.bf16.msra.mxu0 %v1811
    %1887 = vmatprep.subr.bf16.mxu0 0
    %1888 = vmatpush1.bf16.msra.mxu0 %v1812
    %1889 = vmatprep.subr.bf16.mxu0 0
    %1890 = vmatpush1.bf16.msra.mxu0 %v1813
    %1891 = vmatprep.subr.bf16.mxu0 0
    %1892 = vmatpush1.bf16.msra.mxu0 %v1814
    %1893 = vmatprep.subr.bf16.mxu0 0
    %1894 = vmatpush1.bf16.msra.mxu0 %v1815
    %1895 = vmatprep.subr.bf16.mxu0 0
    %1896 = vmatpush1.bf16.msra.mxu0 %v1816
    %1897 = vmatprep.mubr.bf16.mxu0 %v1599
    %1898 = vmatmul.mubr.bf16.gmra.mrb[0].mxu0 %v1598
    %v1899 = vpop.f32.mrb[0].mxu0
    %v1900 = vadd.f32 %v1671, %v1899
    %v1901 = vpop.f32.mrb[0].mxu0
    %v1902 = vpop.f32.mrb[0].mxu0
    %v1903 = vpop.f32.mrb[0].mxu0
    %1904 = vdwg.mxu0
    %1905 = vmatprep.subr.bf16.mxu0 0
    %1906 = vmatpush1.bf16.msra.mxu0 %v1817
    %1907 = vmatprep.subr.bf16.mxu0 0
    %1908 = vmatpush1.bf16.msra.mxu0 %v1818
    %1909 = vmatprep.subr.bf16.mxu0 0
    %1910 = vmatpush1.bf16.msra.mxu0 %v1819
    %1911 = vmatprep.subr.bf16.mxu0 0
    %1912 = vmatpush1.bf16.msra.mxu0 %v1820
    %1913 = vmatprep.subr.bf16.mxu0 0
    %1914 = vmatpush1.bf16.msra.mxu0 %v1821
    %1915 = vmatprep.subr.bf16.mxu0 0
    %1916 = vmatpush1.bf16.msra.mxu0 %v1822
    %1917 = vmatprep.subr.bf16.mxu0 0
    %1918 = vmatpush1.bf16.msra.mxu0 %v1823
    %1919 = vmatprep.subr.bf16.mxu0 0
    %1920 = vmatpush1.bf16.msra.mxu0 %v1824
    %1921 = vmatprep.subr.bf16.mxu0 0
    %1922 = vmatpush1.bf16.msra.mxu0 %v1825
    %1923 = vmatprep.subr.bf16.mxu0 0
    %1924 = vmatpush1.bf16.msra.mxu0 %v1826
    %1925 = vmatprep.subr.bf16.mxu0 0
    %1926 = vmatpush1.bf16.msra.mxu0 %v1827
    %1927 = vmatprep.subr.bf16.mxu0 0
    %1928 = vmatpush1.bf16.msra.mxu0 %v1828
    %1929 = vmatprep.subr.bf16.mxu0 0
    %1930 = vmatpush1.bf16.msra.mxu0 %v1829
    %1931 = vmatprep.subr.bf16.mxu0 0
    %1932 = vmatpush1.bf16.msra.mxu0 %v1830
    %1933 = vmatprep.subr.bf16.mxu0 0
    %1934 = vmatpush1.bf16.msra.mxu0 %v1831
    %1935 = vmatprep.subr.bf16.mxu0 0
    %1936 = vmatpush1.bf16.msra.mxu0 %v1832
    %1937 = vmatprep.mubr.bf16.mxu0 %v1601
    %1938 = vmatmul.mubr.bf16.gmra.mrb[0].mxu0 %v1600
    %v1939 = vpop.f32.mrb[0].mxu0
    %v1940 = vadd.f32 %v1900, %v1939
    %v1941 = vpop.f32.mrb[0].mxu0
    %v1942 = vpop.f32.mrb[0].mxu0
    %v1943 = vpop.f32.mrb[0].mxu0
    %1944 = vdwg.mxu0
    %v1945 = vsub.f32 0.0, %v1940
    %v1946 = vmul.f32 %v1945, 1.442695
    %v1947 = vpow.pop %v1946
    %v1948 = vadd.f32 %v1947, 1.0
    %v1949 = vrcp.pop %v1948
    %vm1950 = vcmask 80896
    %1951 = vst.msk [vmem:[#allocation5] sm:$0xff] %vm1950, %v1949
    // Predicated region
    $region26: #{tpu_custom_call.1} parent=1 // pred_check
      _
    $region27: #{tpu_custom_call.1} parent=1 // pred_check_branch
      %1953 = sbr.rel (0) target = $region29
    $region28: #{tpu_custom_call.1} parent=1 // pred_region
      %s1955 = ssub.s32 128, 128
      %1956 = vsyncadd [#allocation4], %s1955
      %s1958 = sshll.u32 [#allocation5], 4
      %s1959 = int_to_ptr.vmem [resolvable:$true] %s1958
      %1961 = dma.vmem_to_hbm [thread:$0]  %s1959, 128, %s5, [#allocation4]
    $region29: #{tpu_custom_call.1} parent=1 // pred_fallthru
      _
    // Predicated region
    $region30: #{tpu_custom_call.1} parent=1 // pred_check
      _
    $region31: #{tpu_custom_call.1} parent=1 // pred_check_branch
      %1963 = sbr.rel (0) target = $region33
    $region32: #{tpu_custom_call.1} parent=1 // pred_region
      %1964 = dma.done [#allocation4], 128
    $region33: #{tpu_custom_call.1} parent=1 // pred_fallthru
      _
    %1965 = vsyncpa [#allocation3], 1
    %1966 = vsyncpa [#allocation4], 1

</llo_original>
